<compile_context>
chip_gen: v6e
topology: v6e:2x2x1
jax: 0.10.0
libtpu: 0.0.40
codegen_flags: <defaults>
</compile_context>

<pallas_src>
import math

import jax
import jax.numpy as jnp
from jax.experimental import pallas as pl
from jax.experimental.pallas import tpu as pltpu


# --------------------------- wrapper-side weight prep ---------------------------

def _prep_gate_matrix(w, H):
    """Torch gate weight (4H, K), chunks (i, f, g, o) along dim 0.

    Returns (K, 4H) with gate columns reordered to (i, f, o, g) and the
    sigmoid-gate (i/f/o) columns pre-scaled by 0.5 so one tanh in the kernel
    yields tanh(x/2) for them (sigmoid(x) = 0.5*tanh(x/2) + 0.5).
    """
    wi, wf, wg, wo = w[0:H], w[H:2 * H], w[2 * H:3 * H], w[3 * H:4 * H]
    w_r = jnp.concatenate([0.5 * wi, 0.5 * wf, 0.5 * wo, wg], axis=0)
    return jnp.transpose(w_r).astype(jnp.float32)                  # (K, 4H)


def _prep_gate_bias(b, H):
    bi, bf, bg, bo = b[0:H], b[H:2 * H], b[2 * H:3 * H], b[3 * H:4 * H]
    return jnp.concatenate([0.5 * bi, 0.5 * bf, 0.5 * bo, bg]
                           ).reshape(1, 4 * H).astype(jnp.float32)  # (1, 4H)


# --------------------------- fused 2-layer LSTM kernel ---------------------------

def _make_fused_lstm2_kernel(B, T, H):
    """Kernel refs: (x_tm, w_ih0, b0, w_big, b_big, w_lin, b_lin, out).

      x_tm  : (T*B, D)   time-major input (row t*B+b = x[b, t, :])
      w_ih0 : (D, 4H)    layer-0 input weights (reordered / pre-scaled)
      b0    : (1, 4H)    layer-0 combined bias (reordered / pre-scaled)
      w_big : (2H, 8H)   cols [0:4H]  = [W_hh0 ; 0]       (layer-0 recurrence)
                         cols [4H:8H] = [W_ih1 ; W_hh1]   (layer-1 gates)
      b_big : (1, 8H)    [0, b1]
      w_lin : (H, O), b_lin : (1, O)
    """

    def kernel(x_ref, w_ih0_ref, b0_ref, w_big_ref, b_big_ref,
               w_lin_ref, b_lin_ref, out_ref):
        # Constants recovering sigmoid from the single tanh push (hoisted,
        # already at full (B, 4H) shape so no per-step broadcast).
        mul = jnp.concatenate(
            [jnp.full((B, 3 * H), 0.5, jnp.float32),
             jnp.ones((B, H), jnp.float32)], axis=1)
        add = jnp.concatenate(
            [jnp.full((B, 3 * H), 0.5, jnp.float32),
             jnp.zeros((B, H), jnp.float32)], axis=1)

        def cell(gates, c):
            # Sigmoid lanes [0:3H] hold x/2 (weights pre-scaled by 0.5), so a
            # single tanh gives both tanh(x/2) (-> sigmoid) and tanh(x) (g).
            t = jnp.tanh(gates)                      # one EUP push on (B, 4H)
            act = t * mul + add                      # one VPU FMA
            i_g = act[:, 0:H]
            f_g = act[:, H:2 * H]
            o_g = act[:, 2 * H:3 * H]
            g_g = act[:, 3 * H:4 * H]
            c_new = f_g * c + i_g * g_g
            h_new = o_g * jnp.tanh(c_new)
            return h_new, c_new

        # Hoisted layer-0 input projection: one time-major matmul, bias folded.
        proj0 = (jnp.dot(x_ref[...], w_ih0_ref[...],
                         preferred_element_type=jnp.float32)
                 + b0_ref[...])                              # (T*B, 4H)

        w_big = w_big_ref[...]                               # (2H, 8H)
        b_big = jnp.broadcast_to(b_big_ref[...], (B, 8 * H))  # hoisted bcast

        zeros = jnp.zeros((B, H), jnp.float32)
        h0, c0 = zeros, zeros
        h1, c1 = zeros, zeros

        # Wavefront: iteration s runs layer-0 step s and layer-1 step s-1.
        # Both only depend on state from iteration s-1, so they share ONE
        # fused (B,2H)@(2H,8H) gate matmul; dependent chain is T+1 steps.
        for s in range(T + 1):
            if s >= 1:
                z = jnp.concatenate([h0, h1], axis=1)        # (B, 2H)
                res = (jnp.dot(z, w_big,
                               preferred_element_type=jnp.float32)
                       + b_big)                              # (B, 8H)
                # layer-1 step s-1: uses h0_{s-1} (old h0) and h1_{s-2}/c1.
                h1, c1 = cell(res[:, 4 * H:8 * H], c1)
            if s < T:
                gates0 = proj0[s * B:(s + 1) * B, :]
                if s >= 1:
                    # recurrent term h0_{s-1} @ W_hh0 rode along in lanes [0:4H]
                    gates0 = gates0 + res[:, 0:4 * H]
                # (s == 0: h0 is zero -> recurrent contribution vanishes)
                h0, c0 = cell(gates0, c0)
            # TODO(synk): training-mode dropout between layers omitted
            # (F.dropout is identity in eval mode).

        # Final Linear on the last layer's last-timestep hidden state.
        out = (jnp.dot(h1, w_lin_ref[...],
                       preferred_element_type=jnp.float32)
               + b_lin_ref[...])
        out_ref[...] = out.astype(out_ref.dtype)

    return kernel


# ------------------------------ VanillaLSTM forward ------------------------------

@jax.jit
def vanilla_lstm_forward(x, params):
    """x: (B, T, input_size), batch_first like the PyTorch module."""
    B, T, D = x.shape
    lstm_params = params["lstm"]
    assert len(lstm_params) == 2, "fused kernel specialized for 2 LSTM layers"
    (w_ih0, w_hh0, b_ih0, b_hh0), (w_ih1, w_hh1, b_ih1, b_hh1) = lstm_params
    H = w_hh0.shape[1]
    assert w_hh1.shape[1] == H, "fused kernel assumes equal hidden sizes"

    # Time-major (T*B, D); the (B,T,D)->(T,B,D) transpose is free in XLA.
    x_tm = jnp.transpose(x.astype(jnp.float32), (1, 0, 2)).reshape(T * B, D)

    w_ih0_p = _prep_gate_matrix(w_ih0, H)                 # (D, 4H)
    b0_p = _prep_gate_bias(b_ih0 + b_hh0, H)              # (1, 4H)
    w_hh0_p = _prep_gate_matrix(w_hh0, H)                 # (H, 4H)
    w_ih1_p = _prep_gate_matrix(w_ih1, H)                 # (H, 4H)
    w_hh1_p = _prep_gate_matrix(w_hh1, H)                 # (H, 4H)
    b1_p = _prep_gate_bias(b_ih1 + b_hh1, H)              # (1, 4H)

    # Fused [h0|h1] weight: cols [0:4H] = [W_hh0;0], cols [4H:8H] = [W_ih1;W_hh1]
    left = jnp.concatenate([w_hh0_p, jnp.zeros((H, 4 * H), jnp.float32)], axis=0)
    right = jnp.concatenate([w_ih1_p, w_hh1_p], axis=0)
    w_big = jnp.concatenate([left, right], axis=1)        # (2H, 8H)
    b_big = jnp.concatenate(
        [jnp.zeros((1, 4 * H), jnp.float32), b1_p], axis=1)  # (1, 8H)

    w_lin = jnp.transpose(params["lin_w"]).astype(jnp.float32)   # (H, O)
    b_lin = params["lin_b"].reshape(1, -1).astype(jnp.float32)   # (1, O)
    out_size = w_lin.shape[1]

    kernel = _make_fused_lstm2_kernel(B, T, H)
    return pl.pallas_call(
        kernel,
        out_shape=jax.ShapeDtypeStruct((B, out_size), jnp.float32),
        in_specs=[pl.BlockSpec(memory_space=pltpu.MemorySpace.VMEM)] * 7,
        out_specs=pl.BlockSpec(memory_space=pltpu.MemorySpace.VMEM),
    )(x_tm, w_ih0_p, b0_p, w_big, b_big, w_lin, b_lin)


# ------------------------------ deterministic params ------------------------------

def init_params(key, input_size, hidden_sizes, output_size):
    params = {"lstm": []}
    d = input_size
    for h in hidden_sizes:
        key, k1, k2, k3, k4 = jax.random.split(key, 5)
        # weight_ih: xavier-uniform per (h, d) chunk -> same bound for all 4 chunks
        bound = math.sqrt(6.0 / (h + d))
        w_ih = jax.random.uniform(k1, (4 * h, d), jnp.float32, -bound, bound)
        # weight_hh: 4 orthogonal (h, h) chunks
        chunks = []
        for ksub in jax.random.split(k2, 4):
            a = jax.random.normal(ksub, (h, h), jnp.float32)
            q, r = jnp.linalg.qr(a)
            q = q * jnp.sign(jnp.diag(r))[None, :]
            chunks.append(q)
        w_hh = jnp.concatenate(chunks, axis=0)
        # biases: default uniform(-1/sqrt(h), 1/sqrt(h)); forget-gate chunk := 1
        # (in BOTH b_ih and b_hh, matching the PyTorch init_weights loop).
        bb = 1.0 / math.sqrt(h)
        b_ih = jax.random.uniform(k3, (4 * h,), jnp.float32, -bb, bb)
        b_hh = jax.random.uniform(k4, (4 * h,), jnp.float32, -bb, bb)
        b_ih = b_ih.at[h:2 * h].set(1.0)
        b_hh = b_hh.at[h:2 * h].set(1.0)
        params["lstm"].append((w_ih, w_hh, b_ih, b_hh))
        d = h
    key, kw, kb = jax.random.split(key, 3)
    lb = 1.0 / math.sqrt(d)
    params["lin_w"] = jax.random.uniform(kw, (output_size, d), jnp.float32, -lb, lb)
    params["lin_b"] = jax.random.uniform(kb, (output_size,), jnp.float32, -lb, lb)
    return params


# ------------------------------ pure-JAX reference ------------------------------

def _ref_lstm_layer(x_bt, w_ih, w_hh, b_ih, b_hh):
    B, T, _ = x_bt.shape
    H = w_hh.shape[1]
    h = jnp.zeros((B, H), jnp.float32)
    c = jnp.zeros((B, H), jnp.float32)
    outs = []
    for t in range(T):
        g = x_bt[:, t] @ w_ih.T + h @ w_hh.T + b_ih + b_hh
        i, f, gg, o = jnp.split(g, 4, axis=-1)
        c = jax.nn.sigmoid(f) * c + jax.nn.sigmoid(i) * jnp.tanh(gg)
        h = jax.nn.sigmoid(o) * jnp.tanh(c)
        outs.append(h)
    return jnp.stack(outs, axis=1)


def vanilla_lstm_ref(x, params):
    h = x.astype(jnp.float32)
    for (w_ih, w_hh, b_ih, b_hh) in params["lstm"]:
        h = _ref_lstm_layer(h, w_ih, w_hh, b_ih, b_hh)
    last = h[:, -1, :]
    return last @ params["lin_w"].T + params["lin_b"]


# ------------------------------------- main -------------------------------------

if __name__ == "__main__":
    # config: input_size=16, hidden_size_lstm=[32, 32], output_size=8, dropout=0.0
    B, T, INPUT, OUTPUT = 2, 8, 16, 8
    HIDDEN = [32, 32]

    key = jax.random.PRNGKey(0)
    key, kx, kp = jax.random.split(key, 3)
    x = jax.random.normal(kx, (B, T, INPUT), jnp.float32)
    params = init_params(kp, INPUT, HIDDEN, OUTPUT)

    out = jax.block_until_ready(vanilla_lstm_forward(x, params))
    ref = jax.block_until_ready(vanilla_lstm_ref(x, params))

    assert out.shape == (B, OUTPUT), out.shape
    assert jnp.allclose(out, ref, atol=1e-4, rtol=1e-4), (
        f"max abs err {jnp.max(jnp.abs(out - ref))}")

    print("KERNEL_OK")
</pallas_src>

<mosaic_0001>
module attributes {stable_mosaic.version = 11 : i64} {
  func.func @kernel(%arg0: memref<16x16xf32, #tpu.memory_space<vmem>>, %arg1: memref<16x128xf32, #tpu.memory_space<vmem>>, %arg2: memref<1x128xf32, #tpu.memory_space<vmem>>, %arg3: memref<64x256xf32, #tpu.memory_space<vmem>>, %arg4: memref<1x256xf32, #tpu.memory_space<vmem>>, %arg5: memref<32x8xf32, #tpu.memory_space<vmem>>, %arg6: memref<1x8xf32, #tpu.memory_space<vmem>>, %arg7: memref<2x8xf32, #tpu.memory_space<vmem>>) attributes {dimension_semantics = [], scalar_prefetch = 0 : i64, scratch_operands = 0 : i64, tpu.core_type = #tpu.core_type<tc>} {
    %cst = arith.constant 5.000000e-01 : f32
    %0 = vector.broadcast %cst : f32 to vector<2x96xf32>
    %cst_0 = arith.constant 1.000000e+00 : f32
    %1 = vector.broadcast %cst_0 : f32 to vector<2x32xf32>
    %2 = tpu.concatenate %0, %1 in 1 : vector<2x96xf32>, vector<2x32xf32> -> vector<2x128xf32>
    %cst_1 = arith.constant 5.000000e-01 : f32
    %3 = vector.broadcast %cst_1 : f32 to vector<2x96xf32>
    %cst_2 = arith.constant 0.000000e+00 : f32
    %4 = vector.broadcast %cst_2 : f32 to vector<2x32xf32>
    %5 = tpu.concatenate %3, %4 in 1 : vector<2x96xf32>, vector<2x32xf32> -> vector<2x128xf32>
    %c0 = arith.constant 0 : index
    %c0_3 = arith.constant 0 : index
    %6 = vector.load %arg0[%c0, %c0_3] : memref<16x16xf32, #tpu.memory_space<vmem>>, vector<16x16xf32>
    %c0_4 = arith.constant 0 : index
    %c0_5 = arith.constant 0 : index
    %7 = vector.load %arg1[%c0_4, %c0_5] : memref<16x128xf32, #tpu.memory_space<vmem>>, vector<16x128xf32>
    %cst_6 = arith.constant dense<0.000000e+00> : vector<16x128xf32>
    %8 = tpu.matmul %6, %7, %cst_6 {dimension_numbers = #tpu.dot_dimension_numbers<[1], [0], [0], [1], [0, 0, 1, 1], [], []>} : vector<16x16xf32>, vector<16x128xf32>, vector<16x128xf32> -> vector<16x128xf32>
    %c0_7 = arith.constant 0 : index
    %c0_8 = arith.constant 0 : index
    %9 = vector.load %arg2[%c0_7, %c0_8] : memref<1x128xf32, #tpu.memory_space<vmem>>, vector<1x128xf32>
    %10 = vector.broadcast %9 : vector<1x128xf32> to vector<16x128xf32>
    %11 = arith.addf %8, %10 : vector<16x128xf32>
    %c0_9 = arith.constant 0 : index
    %c0_10 = arith.constant 0 : index
    %12 = vector.load %arg3[%c0_9, %c0_10] : memref<64x256xf32, #tpu.memory_space<vmem>>, vector<64x256xf32>
    %c0_11 = arith.constant 0 : index
    %c0_12 = arith.constant 0 : index
    %13 = vector.load %arg4[%c0_11, %c0_12] : memref<1x256xf32, #tpu.memory_space<vmem>>, vector<1x256xf32>
    %14 = vector.shape_cast %13 : vector<1x256xf32> to vector<1x256xf32>
    %15 = vector.broadcast %14 : vector<1x256xf32> to vector<2x256xf32>
    %cst_13 = arith.constant 0.000000e+00 : f32
    %16 = vector.broadcast %cst_13 : f32 to vector<2x32xf32>
    %17 = vector.extract_strided_slice %11 {offsets = [0, 0], sizes = [2, 128], strides = [1, 1]} : vector<16x128xf32> to vector<2x128xf32>
    %18 = math.tanh %17 : vector<2x128xf32>
    %19 = arith.mulf %18, %2 : vector<2x128xf32>
    %20 = arith.addf %19, %5 : vector<2x128xf32>
    %21 = vector.extract_strided_slice %20 {offsets = [0, 0], sizes = [2, 32], strides = [1, 1]} : vector<2x128xf32> to vector<2x32xf32>
    %22 = vector.extract_strided_slice %20 {offsets = [0, 32], sizes = [2, 32], strides = [1, 1]} : vector<2x128xf32> to vector<2x32xf32>
    %23 = vector.extract_strided_slice %20 {offsets = [0, 64], sizes = [2, 32], strides = [1, 1]} : vector<2x128xf32> to vector<2x32xf32>
    %24 = vector.extract_strided_slice %20 {offsets = [0, 96], sizes = [2, 32], strides = [1, 1]} : vector<2x128xf32> to vector<2x32xf32>
    %25 = arith.mulf %22, %16 : vector<2x32xf32>
    %26 = arith.mulf %21, %24 : vector<2x32xf32>
    %27 = arith.addf %25, %26 : vector<2x32xf32>
    %28 = math.tanh %27 : vector<2x32xf32>
    %29 = arith.mulf %23, %28 : vector<2x32xf32>
    %30 = tpu.concatenate %29, %16 in 1 : vector<2x32xf32>, vector<2x32xf32> -> vector<2x64xf32>
    %cst_14 = arith.constant dense<0.000000e+00> : vector<2x256xf32>
    %31 = tpu.matmul %30, %12, %cst_14 {dimension_numbers = #tpu.dot_dimension_numbers<[1], [0], [0], [1], [0, 0, 1, 1], [], []>} : vector<2x64xf32>, vector<64x256xf32>, vector<2x256xf32> -> vector<2x256xf32>
    %32 = arith.addf %31, %15 : vector<2x256xf32>
    %33 = vector.extract_strided_slice %32 {offsets = [0, 128], sizes = [2, 128], strides = [1, 1]} : vector<2x256xf32> to vector<2x128xf32>
    %34 = math.tanh %33 : vector<2x128xf32>
    %35 = arith.mulf %34, %2 : vector<2x128xf32>
    %36 = arith.addf %35, %5 : vector<2x128xf32>
    %37 = vector.extract_strided_slice %36 {offsets = [0, 0], sizes = [2, 32], strides = [1, 1]} : vector<2x128xf32> to vector<2x32xf32>
    %38 = vector.extract_strided_slice %36 {offsets = [0, 32], sizes = [2, 32], strides = [1, 1]} : vector<2x128xf32> to vector<2x32xf32>
    %39 = vector.extract_strided_slice %36 {offsets = [0, 64], sizes = [2, 32], strides = [1, 1]} : vector<2x128xf32> to vector<2x32xf32>
    %40 = vector.extract_strided_slice %36 {offsets = [0, 96], sizes = [2, 32], strides = [1, 1]} : vector<2x128xf32> to vector<2x32xf32>
    %41 = arith.mulf %38, %16 : vector<2x32xf32>
    %42 = arith.mulf %37, %40 : vector<2x32xf32>
    %43 = arith.addf %41, %42 : vector<2x32xf32>
    %44 = math.tanh %43 : vector<2x32xf32>
    %45 = arith.mulf %39, %44 : vector<2x32xf32>
    %46 = vector.extract_strided_slice %11 {offsets = [2, 0], sizes = [2, 128], strides = [1, 1]} : vector<16x128xf32> to vector<2x128xf32>
    %47 = vector.extract_strided_slice %32 {offsets = [0, 0], sizes = [2, 128], strides = [1, 1]} : vector<2x256xf32> to vector<2x128xf32>
    %48 = arith.addf %46, %47 : vector<2x128xf32>
    %49 = math.tanh %48 : vector<2x128xf32>
    %50 = arith.mulf %49, %2 : vector<2x128xf32>
    %51 = arith.addf %50, %5 : vector<2x128xf32>
    %52 = vector.extract_strided_slice %51 {offsets = [0, 0], sizes = [2, 32], strides = [1, 1]} : vector<2x128xf32> to vector<2x32xf32>
    %53 = vector.extract_strided_slice %51 {offsets = [0, 32], sizes = [2, 32], strides = [1, 1]} : vector<2x128xf32> to vector<2x32xf32>
    %54 = vector.extract_strided_slice %51 {offsets = [0, 64], sizes = [2, 32], strides = [1, 1]} : vector<2x128xf32> to vector<2x32xf32>
    %55 = vector.extract_strided_slice %51 {offsets = [0, 96], sizes = [2, 32], strides = [1, 1]} : vector<2x128xf32> to vector<2x32xf32>
    %56 = arith.mulf %53, %27 : vector<2x32xf32>
    %57 = arith.mulf %52, %55 : vector<2x32xf32>
    %58 = arith.addf %56, %57 : vector<2x32xf32>
    %59 = math.tanh %58 : vector<2x32xf32>
    %60 = arith.mulf %54, %59 : vector<2x32xf32>
    %61 = tpu.concatenate %60, %45 in 1 : vector<2x32xf32>, vector<2x32xf32> -> vector<2x64xf32>
    %cst_15 = arith.constant dense<0.000000e+00> : vector<2x256xf32>
    %62 = tpu.matmul %61, %12, %cst_15 {dimension_numbers = #tpu.dot_dimension_numbers<[1], [0], [0], [1], [0, 0, 1, 1], [], []>} : vector<2x64xf32>, vector<64x256xf32>, vector<2x256xf32> -> vector<2x256xf32>
    %63 = arith.addf %62, %15 : vector<2x256xf32>
    %64 = vector.extract_strided_slice %63 {offsets = [0, 128], sizes = [2, 128], strides = [1, 1]} : vector<2x256xf32> to vector<2x128xf32>
    %65 = math.tanh %64 : vector<2x128xf32>
    %66 = arith.mulf %65, %2 : vector<2x128xf32>
    %67 = arith.addf %66, %5 : vector<2x128xf32>
    %68 = vector.extract_strided_slice %67 {offsets = [0, 0], sizes = [2, 32], strides = [1, 1]} : vector<2x128xf32> to vector<2x32xf32>
    %69 = vector.extract_strided_slice %67 {offsets = [0, 32], sizes = [2, 32], strides = [1, 1]} : vector<2x128xf32> to vector<2x32xf32>
    %70 = vector.extract_strided_slice %67 {offsets = [0, 64], sizes = [2, 32], strides = [1, 1]} : vector<2x128xf32> to vector<2x32xf32>
    %71 = vector.extract_strided_slice %67 {offsets = [0, 96], sizes = [2, 32], strides = [1, 1]} : vector<2x128xf32> to vector<2x32xf32>
    %72 = arith.mulf %69, %43 : vector<2x32xf32>
    %73 = arith.mulf %68, %71 : vector<2x32xf32>
    %74 = arith.addf %72, %73 : vector<2x32xf32>
    %75 = math.tanh %74 : vector<2x32xf32>
    %76 = arith.mulf %70, %75 : vector<2x32xf32>
    %77 = vector.extract_strided_slice %11 {offsets = [4, 0], sizes = [2, 128], strides = [1, 1]} : vector<16x128xf32> to vector<2x128xf32>
    %78 = vector.extract_strided_slice %63 {offsets = [0, 0], sizes = [2, 128], strides = [1, 1]} : vector<2x256xf32> to vector<2x128xf32>
    %79 = arith.addf %77, %78 : vector<2x128xf32>
    %80 = math.tanh %79 : vector<2x128xf32>
    %81 = arith.mulf %80, %2 : vector<2x128xf32>
    %82 = arith.addf %81, %5 : vector<2x128xf32>
    %83 = vector.extract_strided_slice %82 {offsets = [0, 0], sizes = [2, 32], strides = [1, 1]} : vector<2x128xf32> to vector<2x32xf32>
    %84 = vector.extract_strided_slice %82 {offsets = [0, 32], sizes = [2, 32], strides = [1, 1]} : vector<2x128xf32> to vector<2x32xf32>
    %85 = vector.extract_strided_slice %82 {offsets = [0, 64], sizes = [2, 32], strides = [1, 1]} : vector<2x128xf32> to vector<2x32xf32>
    %86 = vector.extract_strided_slice %82 {offsets = [0, 96], sizes = [2, 32], strides = [1, 1]} : vector<2x128xf32> to vector<2x32xf32>
    %87 = arith.mulf %84, %58 : vector<2x32xf32>
    %88 = arith.mulf %83, %86 : vector<2x32xf32>
    %89 = arith.addf %87, %88 : vector<2x32xf32>
    %90 = math.tanh %89 : vector<2x32xf32>
    %91 = arith.mulf %85, %90 : vector<2x32xf32>
    %92 = tpu.concatenate %91, %76 in 1 : vector<2x32xf32>, vector<2x32xf32> -> vector<2x64xf32>
    %cst_16 = arith.constant dense<0.000000e+00> : vector<2x256xf32>
    %93 = tpu.matmul %92, %12, %cst_16 {dimension_numbers = #tpu.dot_dimension_numbers<[1], [0], [0], [1], [0, 0, 1, 1], [], []>} : vector<2x64xf32>, vector<64x256xf32>, vector<2x256xf32> -> vector<2x256xf32>
    %94 = arith.addf %93, %15 : vector<2x256xf32>
    %95 = vector.extract_strided_slice %94 {offsets = [0, 128], sizes = [2, 128], strides = [1, 1]} : vector<2x256xf32> to vector<2x128xf32>
    %96 = math.tanh %95 : vector<2x128xf32>
    %97 = arith.mulf %96, %2 : vector<2x128xf32>
    %98 = arith.addf %97, %5 : vector<2x128xf32>
    %99 = vector.extract_strided_slice %98 {offsets = [0, 0], sizes = [2, 32], strides = [1, 1]} : vector<2x128xf32> to vector<2x32xf32>
    %100 = vector.extract_strided_slice %98 {offsets = [0, 32], sizes = [2, 32], strides = [1, 1]} : vector<2x128xf32> to vector<2x32xf32>
    %101 = vector.extract_strided_slice %98 {offsets = [0, 64], sizes = [2, 32], strides = [1, 1]} : vector<2x128xf32> to vector<2x32xf32>
    %102 = vector.extract_strided_slice %98 {offsets = [0, 96], sizes = [2, 32], strides = [1, 1]} : vector<2x128xf32> to vector<2x32xf32>
    %103 = arith.mulf %100, %74 : vector<2x32xf32>
    %104 = arith.mulf %99, %102 : vector<2x32xf32>
    %105 = arith.addf %103, %104 : vector<2x32xf32>
    %106 = math.tanh %105 : vector<2x32xf32>
    %107 = arith.mulf %101, %106 : vector<2x32xf32>
    %108 = vector.extract_strided_slice %11 {offsets = [6, 0], sizes = [2, 128], strides = [1, 1]} : vector<16x128xf32> to vector<2x128xf32>
    %109 = vector.extract_strided_slice %94 {offsets = [0, 0], sizes = [2, 128], strides = [1, 1]} : vector<2x256xf32> to vector<2x128xf32>
    %110 = arith.addf %108, %109 : vector<2x128xf32>
    %111 = math.tanh %110 : vector<2x128xf32>
    %112 = arith.mulf %111, %2 : vector<2x128xf32>
    %113 = arith.addf %112, %5 : vector<2x128xf32>
    %114 = vector.extract_strided_slice %113 {offsets = [0, 0], sizes = [2, 32], strides = [1, 1]} : vector<2x128xf32> to vector<2x32xf32>
    %115 = vector.extract_strided_slice %113 {offsets = [0, 32], sizes = [2, 32], strides = [1, 1]} : vector<2x128xf32> to vector<2x32xf32>
    %116 = vector.extract_strided_slice %113 {offsets = [0, 64], sizes = [2, 32], strides = [1, 1]} : vector<2x128xf32> to vector<2x32xf32>
    %117 = vector.extract_strided_slice %113 {offsets = [0, 96], sizes = [2, 32], strides = [1, 1]} : vector<2x128xf32> to vector<2x32xf32>
    %118 = arith.mulf %115, %89 : vector<2x32xf32>
    %119 = arith.mulf %114, %117 : vector<2x32xf32>
    %120 = arith.addf %118, %119 : vector<2x32xf32>
    %121 = math.tanh %120 : vector<2x32xf32>
    %122 = arith.mulf %116, %121 : vector<2x32xf32>
    %123 = tpu.concatenate %122, %107 in 1 : vector<2x32xf32>, vector<2x32xf32> -> vector<2x64xf32>
    %cst_17 = arith.constant dense<0.000000e+00> : vector<2x256xf32>
    %124 = tpu.matmul %123, %12, %cst_17 {dimension_numbers = #tpu.dot_dimension_numbers<[1], [0], [0], [1], [0, 0, 1, 1], [], []>} : vector<2x64xf32>, vector<64x256xf32>, vector<2x256xf32> -> vector<2x256xf32>
    %125 = arith.addf %124, %15 : vector<2x256xf32>
    %126 = vector.extract_strided_slice %125 {offsets = [0, 128], sizes = [2, 128], strides = [1, 1]} : vector<2x256xf32> to vector<2x128xf32>
    %127 = math.tanh %126 : vector<2x128xf32>
    %128 = arith.mulf %127, %2 : vector<2x128xf32>
    %129 = arith.addf %128, %5 : vector<2x128xf32>
    %130 = vector.extract_strided_slice %129 {offsets = [0, 0], sizes = [2, 32], strides = [1, 1]} : vector<2x128xf32> to vector<2x32xf32>
    %131 = vector.extract_strided_slice %129 {offsets = [0, 32], sizes = [2, 32], strides = [1, 1]} : vector<2x128xf32> to vector<2x32xf32>
    %132 = vector.extract_strided_slice %129 {offsets = [0, 64], sizes = [2, 32], strides = [1, 1]} : vector<2x128xf32> to vector<2x32xf32>
    %133 = vector.extract_strided_slice %129 {offsets = [0, 96], sizes = [2, 32], strides = [1, 1]} : vector<2x128xf32> to vector<2x32xf32>
    %134 = arith.mulf %131, %105 : vector<2x32xf32>
    %135 = arith.mulf %130, %133 : vector<2x32xf32>
    %136 = arith.addf %134, %135 : vector<2x32xf32>
    %137 = math.tanh %136 : vector<2x32xf32>
    %138 = arith.mulf %132, %137 : vector<2x32xf32>
    %139 = vector.extract_strided_slice %11 {offsets = [8, 0], sizes = [2, 128], strides = [1, 1]} : vector<16x128xf32> to vector<2x128xf32>
    %140 = vector.extract_strided_slice %125 {offsets = [0, 0], sizes = [2, 128], strides = [1, 1]} : vector<2x256xf32> to vector<2x128xf32>
    %141 = arith.addf %139, %140 : vector<2x128xf32>
    %142 = math.tanh %141 : vector<2x128xf32>
    %143 = arith.mulf %142, %2 : vector<2x128xf32>
    %144 = arith.addf %143, %5 : vector<2x128xf32>
    %145 = vector.extract_strided_slice %144 {offsets = [0, 0], sizes = [2, 32], strides = [1, 1]} : vector<2x128xf32> to vector<2x32xf32>
    %146 = vector.extract_strided_slice %144 {offsets = [0, 32], sizes = [2, 32], strides = [1, 1]} : vector<2x128xf32> to vector<2x32xf32>
    %147 = vector.extract_strided_slice %144 {offsets = [0, 64], sizes = [2, 32], strides = [1, 1]} : vector<2x128xf32> to vector<2x32xf32>
    %148 = vector.extract_strided_slice %144 {offsets = [0, 96], sizes = [2, 32], strides = [1, 1]} : vector<2x128xf32> to vector<2x32xf32>
    %149 = arith.mulf %146, %120 : vector<2x32xf32>
    %150 = arith.mulf %145, %148 : vector<2x32xf32>
    %151 = arith.addf %149, %150 : vector<2x32xf32>
    %152 = math.tanh %151 : vector<2x32xf32>
    %153 = arith.mulf %147, %152 : vector<2x32xf32>
    %154 = tpu.concatenate %153, %138 in 1 : vector<2x32xf32>, vector<2x32xf32> -> vector<2x64xf32>
    %cst_18 = arith.constant dense<0.000000e+00> : vector<2x256xf32>
    %155 = tpu.matmul %154, %12, %cst_18 {dimension_numbers = #tpu.dot_dimension_numbers<[1], [0], [0], [1], [0, 0, 1, 1], [], []>} : vector<2x64xf32>, vector<64x256xf32>, vector<2x256xf32> -> vector<2x256xf32>
    %156 = arith.addf %155, %15 : vector<2x256xf32>
    %157 = vector.extract_strided_slice %156 {offsets = [0, 128], sizes = [2, 128], strides = [1, 1]} : vector<2x256xf32> to vector<2x128xf32>
    %158 = math.tanh %157 : vector<2x128xf32>
    %159 = arith.mulf %158, %2 : vector<2x128xf32>
    %160 = arith.addf %159, %5 : vector<2x128xf32>
    %161 = vector.extract_strided_slice %160 {offsets = [0, 0], sizes = [2, 32], strides = [1, 1]} : vector<2x128xf32> to vector<2x32xf32>
    %162 = vector.extract_strided_slice %160 {offsets = [0, 32], sizes = [2, 32], strides = [1, 1]} : vector<2x128xf32> to vector<2x32xf32>
    %163 = vector.extract_strided_slice %160 {offsets = [0, 64], sizes = [2, 32], strides = [1, 1]} : vector<2x128xf32> to vector<2x32xf32>
    %164 = vector.extract_strided_slice %160 {offsets = [0, 96], sizes = [2, 32], strides = [1, 1]} : vector<2x128xf32> to vector<2x32xf32>
    %165 = arith.mulf %162, %136 : vector<2x32xf32>
    %166 = arith.mulf %161, %164 : vector<2x32xf32>
    %167 = arith.addf %165, %166 : vector<2x32xf32>
    %168 = math.tanh %167 : vector<2x32xf32>
    %169 = arith.mulf %163, %168 : vector<2x32xf32>
    %170 = vector.extract_strided_slice %11 {offsets = [10, 0], sizes = [2, 128], strides = [1, 1]} : vector<16x128xf32> to vector<2x128xf32>
    %171 = vector.extract_strided_slice %156 {offsets = [0, 0], sizes = [2, 128], strides = [1, 1]} : vector<2x256xf32> to vector<2x128xf32>
    %172 = arith.addf %170, %171 : vector<2x128xf32>
    %173 = math.tanh %172 : vector<2x128xf32>
    %174 = arith.mulf %173, %2 : vector<2x128xf32>
    %175 = arith.addf %174, %5 : vector<2x128xf32>
    %176 = vector.extract_strided_slice %175 {offsets = [0, 0], sizes = [2, 32], strides = [1, 1]} : vector<2x128xf32> to vector<2x32xf32>
    %177 = vector.extract_strided_slice %175 {offsets = [0, 32], sizes = [2, 32], strides = [1, 1]} : vector<2x128xf32> to vector<2x32xf32>
    %178 = vector.extract_strided_slice %175 {offsets = [0, 64], sizes = [2, 32], strides = [1, 1]} : vector<2x128xf32> to vector<2x32xf32>
    %179 = vector.extract_strided_slice %175 {offsets = [0, 96], sizes = [2, 32], strides = [1, 1]} : vector<2x128xf32> to vector<2x32xf32>
    %180 = arith.mulf %177, %151 : vector<2x32xf32>
    %181 = arith.mulf %176, %179 : vector<2x32xf32>
    %182 = arith.addf %180, %181 : vector<2x32xf32>
    %183 = math.tanh %182 : vector<2x32xf32>
    %184 = arith.mulf %178, %183 : vector<2x32xf32>
    %185 = tpu.concatenate %184, %169 in 1 : vector<2x32xf32>, vector<2x32xf32> -> vector<2x64xf32>
    %cst_19 = arith.constant dense<0.000000e+00> : vector<2x256xf32>
    %186 = tpu.matmul %185, %12, %cst_19 {dimension_numbers = #tpu.dot_dimension_numbers<[1], [0], [0], [1], [0, 0, 1, 1], [], []>} : vector<2x64xf32>, vector<64x256xf32>, vector<2x256xf32> -> vector<2x256xf32>
    %187 = arith.addf %186, %15 : vector<2x256xf32>
    %188 = vector.extract_strided_slice %187 {offsets = [0, 128], sizes = [2, 128], strides = [1, 1]} : vector<2x256xf32> to vector<2x128xf32>
    %189 = math.tanh %188 : vector<2x128xf32>
    %190 = arith.mulf %189, %2 : vector<2x128xf32>
    %191 = arith.addf %190, %5 : vector<2x128xf32>
    %192 = vector.extract_strided_slice %191 {offsets = [0, 0], sizes = [2, 32], strides = [1, 1]} : vector<2x128xf32> to vector<2x32xf32>
    %193 = vector.extract_strided_slice %191 {offsets = [0, 32], sizes = [2, 32], strides = [1, 1]} : vector<2x128xf32> to vector<2x32xf32>
    %194 = vector.extract_strided_slice %191 {offsets = [0, 64], sizes = [2, 32], strides = [1, 1]} : vector<2x128xf32> to vector<2x32xf32>
    %195 = vector.extract_strided_slice %191 {offsets = [0, 96], sizes = [2, 32], strides = [1, 1]} : vector<2x128xf32> to vector<2x32xf32>
    %196 = arith.mulf %193, %167 : vector<2x32xf32>
    %197 = arith.mulf %192, %195 : vector<2x32xf32>
    %198 = arith.addf %196, %197 : vector<2x32xf32>
    %199 = math.tanh %198 : vector<2x32xf32>
    %200 = arith.mulf %194, %199 : vector<2x32xf32>
    %201 = vector.extract_strided_slice %11 {offsets = [12, 0], sizes = [2, 128], strides = [1, 1]} : vector<16x128xf32> to vector<2x128xf32>
    %202 = vector.extract_strided_slice %187 {offsets = [0, 0], sizes = [2, 128], strides = [1, 1]} : vector<2x256xf32> to vector<2x128xf32>
    %203 = arith.addf %201, %202 : vector<2x128xf32>
    %204 = math.tanh %203 : vector<2x128xf32>
    %205 = arith.mulf %204, %2 : vector<2x128xf32>
    %206 = arith.addf %205, %5 : vector<2x128xf32>
    %207 = vector.extract_strided_slice %206 {offsets = [0, 0], sizes = [2, 32], strides = [1, 1]} : vector<2x128xf32> to vector<2x32xf32>
    %208 = vector.extract_strided_slice %206 {offsets = [0, 32], sizes = [2, 32], strides = [1, 1]} : vector<2x128xf32> to vector<2x32xf32>
    %209 = vector.extract_strided_slice %206 {offsets = [0, 64], sizes = [2, 32], strides = [1, 1]} : vector<2x128xf32> to vector<2x32xf32>
    %210 = vector.extract_strided_slice %206 {offsets = [0, 96], sizes = [2, 32], strides = [1, 1]} : vector<2x128xf32> to vector<2x32xf32>
    %211 = arith.mulf %208, %182 : vector<2x32xf32>
    %212 = arith.mulf %207, %210 : vector<2x32xf32>
    %213 = arith.addf %211, %212 : vector<2x32xf32>
    %214 = math.tanh %213 : vector<2x32xf32>
    %215 = arith.mulf %209, %214 : vector<2x32xf32>
    %216 = tpu.concatenate %215, %200 in 1 : vector<2x32xf32>, vector<2x32xf32> -> vector<2x64xf32>
    %cst_20 = arith.constant dense<0.000000e+00> : vector<2x256xf32>
    %217 = tpu.matmul %216, %12, %cst_20 {dimension_numbers = #tpu.dot_dimension_numbers<[1], [0], [0], [1], [0, 0, 1, 1], [], []>} : vector<2x64xf32>, vector<64x256xf32>, vector<2x256xf32> -> vector<2x256xf32>
    %218 = arith.addf %217, %15 : vector<2x256xf32>
    %219 = vector.extract_strided_slice %218 {offsets = [0, 128], sizes = [2, 128], strides = [1, 1]} : vector<2x256xf32> to vector<2x128xf32>
    %220 = math.tanh %219 : vector<2x128xf32>
    %221 = arith.mulf %220, %2 : vector<2x128xf32>
    %222 = arith.addf %221, %5 : vector<2x128xf32>
    %223 = vector.extract_strided_slice %222 {offsets = [0, 0], sizes = [2, 32], strides = [1, 1]} : vector<2x128xf32> to vector<2x32xf32>
    %224 = vector.extract_strided_slice %222 {offsets = [0, 32], sizes = [2, 32], strides = [1, 1]} : vector<2x128xf32> to vector<2x32xf32>
    %225 = vector.extract_strided_slice %222 {offsets = [0, 64], sizes = [2, 32], strides = [1, 1]} : vector<2x128xf32> to vector<2x32xf32>
    %226 = vector.extract_strided_slice %222 {offsets = [0, 96], sizes = [2, 32], strides = [1, 1]} : vector<2x128xf32> to vector<2x32xf32>
    %227 = arith.mulf %224, %198 : vector<2x32xf32>
    %228 = arith.mulf %223, %226 : vector<2x32xf32>
    %229 = arith.addf %227, %228 : vector<2x32xf32>
    %230 = math.tanh %229 : vector<2x32xf32>
    %231 = arith.mulf %225, %230 : vector<2x32xf32>
    %232 = vector.extract_strided_slice %11 {offsets = [14, 0], sizes = [2, 128], strides = [1, 1]} : vector<16x128xf32> to vector<2x128xf32>
    %233 = vector.extract_strided_slice %218 {offsets = [0, 0], sizes = [2, 128], strides = [1, 1]} : vector<2x256xf32> to vector<2x128xf32>
    %234 = arith.addf %232, %233 : vector<2x128xf32>
    %235 = math.tanh %234 : vector<2x128xf32>
    %236 = arith.mulf %235, %2 : vector<2x128xf32>
    %237 = arith.addf %236, %5 : vector<2x128xf32>
    %238 = vector.extract_strided_slice %237 {offsets = [0, 0], sizes = [2, 32], strides = [1, 1]} : vector<2x128xf32> to vector<2x32xf32>
    %239 = vector.extract_strided_slice %237 {offsets = [0, 32], sizes = [2, 32], strides = [1, 1]} : vector<2x128xf32> to vector<2x32xf32>
    %240 = vector.extract_strided_slice %237 {offsets = [0, 64], sizes = [2, 32], strides = [1, 1]} : vector<2x128xf32> to vector<2x32xf32>
    %241 = vector.extract_strided_slice %237 {offsets = [0, 96], sizes = [2, 32], strides = [1, 1]} : vector<2x128xf32> to vector<2x32xf32>
    %242 = arith.mulf %239, %213 : vector<2x32xf32>
    %243 = arith.mulf %238, %241 : vector<2x32xf32>
    %244 = arith.addf %242, %243 : vector<2x32xf32>
    %245 = math.tanh %244 : vector<2x32xf32>
    %246 = arith.mulf %240, %245 : vector<2x32xf32>
    %247 = tpu.concatenate %246, %231 in 1 : vector<2x32xf32>, vector<2x32xf32> -> vector<2x64xf32>
    %cst_21 = arith.constant dense<0.000000e+00> : vector<2x256xf32>
    %248 = tpu.matmul %247, %12, %cst_21 {dimension_numbers = #tpu.dot_dimension_numbers<[1], [0], [0], [1], [0, 0, 1, 1], [], []>} : vector<2x64xf32>, vector<64x256xf32>, vector<2x256xf32> -> vector<2x256xf32>
    %249 = arith.addf %248, %15 : vector<2x256xf32>
    %250 = vector.extract_strided_slice %249 {offsets = [0, 128], sizes = [2, 128], strides = [1, 1]} : vector<2x256xf32> to vector<2x128xf32>
    %251 = math.tanh %250 : vector<2x128xf32>
    %252 = arith.mulf %251, %2 : vector<2x128xf32>
    %253 = arith.addf %252, %5 : vector<2x128xf32>
    %254 = vector.extract_strided_slice %253 {offsets = [0, 0], sizes = [2, 32], strides = [1, 1]} : vector<2x128xf32> to vector<2x32xf32>
    %255 = vector.extract_strided_slice %253 {offsets = [0, 32], sizes = [2, 32], strides = [1, 1]} : vector<2x128xf32> to vector<2x32xf32>
    %256 = vector.extract_strided_slice %253 {offsets = [0, 64], sizes = [2, 32], strides = [1, 1]} : vector<2x128xf32> to vector<2x32xf32>
    %257 = vector.extract_strided_slice %253 {offsets = [0, 96], sizes = [2, 32], strides = [1, 1]} : vector<2x128xf32> to vector<2x32xf32>
    %258 = arith.mulf %255, %229 : vector<2x32xf32>
    %259 = arith.mulf %254, %257 : vector<2x32xf32>
    %260 = arith.addf %258, %259 : vector<2x32xf32>
    %261 = math.tanh %260 : vector<2x32xf32>
    %262 = arith.mulf %256, %261 : vector<2x32xf32>
    %c0_22 = arith.constant 0 : index
    %c0_23 = arith.constant 0 : index
    %263 = vector.load %arg5[%c0_22, %c0_23] : memref<32x8xf32, #tpu.memory_space<vmem>>, vector<32x8xf32>
    %cst_24 = arith.constant dense<0.000000e+00> : vector<2x8xf32>
    %264 = tpu.matmul %262, %263, %cst_24 {dimension_numbers = #tpu.dot_dimension_numbers<[1], [0], [0], [1], [0, 0, 1, 1], [], []>} : vector<2x32xf32>, vector<32x8xf32>, vector<2x8xf32> -> vector<2x8xf32>
    %c0_25 = arith.constant 0 : index
    %c0_26 = arith.constant 0 : index
    %265 = vector.load %arg6[%c0_25, %c0_26] : memref<1x8xf32, #tpu.memory_space<vmem>>, vector<1x8xf32>
    %266 = vector.broadcast %265 : vector<1x8xf32> to vector<2x8xf32>
    %267 = arith.addf %264, %266 : vector<2x8xf32>
    %c0_27 = arith.constant 0 : index
    %c0_28 = arith.constant 0 : index
    %268 = vector.load %arg7[%c0_27, %c0_28] : memref<2x8xf32, #tpu.memory_space<vmem>>, vector<2x8xf32>
    tpu.vector_store %arg7[%c0_27, %c0_28], %267 {strides = array<i32>} : memref<2x8xf32, #tpu.memory_space<vmem>>, vector<2x8xf32>,
    return
  }
}

</mosaic_0001>

<llo_original>
// kernel: vanilla_lstm_forward.1
$region0: #{vanilla_lstm_forward.1}
  #allocation0 [shape = 'u32[]', space=smem, size = 0x4, offset = 0x4, fixed_abs, tag = 'smem constant byte address 0x4 - core index']
  #allocation1 [shape = 'u32[144,128]{1,0:T(1,128)}', space=vmem, size = 0x12000, scoped, tag = 'internal scratch']
  %s0 = inlined_call_operand.vmem [shape: f32[16,16], index: 0, kind: input, shape index: {}]
  %s1 = inlined_call_operand.vmem [shape: f32[16,128], index: 1, kind: input, shape index: {}]
  %s2 = inlined_call_operand.vmem [shape: f32[1,128], index: 2, kind: input, shape index: {}]
  %s3 = inlined_call_operand.vmem [shape: f32[64,256], index: 3, kind: input, shape index: {}]
  %s4 = inlined_call_operand.vmem [shape: f32[1,256], index: 4, kind: input, shape index: {}]
  %s5 = inlined_call_operand.vmem [shape: f32[32,8], index: 5, kind: input, shape index: {}]
  %s6 = inlined_call_operand.vmem [shape: f32[1,8], index: 6, kind: input, shape index: {}]
  %s7 = inlined_call_operand.hbm [shape: f32[2,8], index: 7, kind: output, shape index: {}]
  %s8 = sld [smem:[#allocation0]]
  $region38: #{vanilla_lstm_forward.1} parent=0
    _
  %s10 = ssub.s32 1, %s8
  %s11 = scalar_select 0, %s10, %s8
  $region1: #{vanilla_lstm_forward.1} parent=0
    #allocation2 [shape = 'u8[1024]{0}', space=vmem, size = 0x400, scoped, tag = 'output window, operand 0, single buffered']
    #allocation3 [shape = 's32[1]{0}', space=sflag, size = 0x4, scoped, tag = 'scoped memory for vanilla_lstm_forward.1']
    %12 = vsyncpa [#allocation3], 0
    // Predicated region
    $region2: #{vanilla_lstm_forward.1} parent=1 // pred_check
      _
    $region3: #{vanilla_lstm_forward.1} parent=1 // pred_check_branch
      %14 = sbr.rel (0) target = $region5
    $region4: #{vanilla_lstm_forward.1} parent=1 // pred_region
      _
    $region5: #{vanilla_lstm_forward.1} parent=1 // pred_fallthru
      _
    // Predicated region
    $region6: #{vanilla_lstm_forward.1} parent=1 // pred_check
      _
    $region7: #{vanilla_lstm_forward.1} parent=1 // pred_check_branch
      %16 = sbr.rel (0) target = $region9
    $region8: #{vanilla_lstm_forward.1} parent=1 // pred_region
      _
    $region9: #{vanilla_lstm_forward.1} parent=1 // pred_fallthru
      _
    // Predicated region
    $region10: #{vanilla_lstm_forward.1} parent=1 // pred_check
      _
    $region11: #{vanilla_lstm_forward.1} parent=1 // pred_check_branch
      %18 = sbr.rel (0) target = $region13
    $region12: #{vanilla_lstm_forward.1} parent=1 // pred_region
      _
    $region13: #{vanilla_lstm_forward.1} parent=1 // pred_fallthru
      _
    // Predicated region
    $region14: #{vanilla_lstm_forward.1} parent=1 // pred_check
      _
    $region15: #{vanilla_lstm_forward.1} parent=1 // pred_check_branch
      %20 = sbr.rel (0) target = $region17
    $region16: #{vanilla_lstm_forward.1} parent=1 // pred_region
      _
    $region17: #{vanilla_lstm_forward.1} parent=1 // pred_fallthru
      _
    // Predicated region
    $region18: #{vanilla_lstm_forward.1} parent=1 // pred_check
      _
    $region19: #{vanilla_lstm_forward.1} parent=1 // pred_check_branch
      %22 = sbr.rel (0) target = $region21
    $region20: #{vanilla_lstm_forward.1} parent=1 // pred_region
      _
    $region21: #{vanilla_lstm_forward.1} parent=1 // pred_fallthru
      _
    // Predicated region
    $region22: #{vanilla_lstm_forward.1} parent=1 // pred_check
      _
    $region23: #{vanilla_lstm_forward.1} parent=1 // pred_check_branch
      %24 = sbr.rel (0) target = $region25
    $region24: #{vanilla_lstm_forward.1} parent=1 // pred_region
      _
    $region25: #{vanilla_lstm_forward.1} parent=1 // pred_fallthru
      _
    // Predicated region
    $region26: #{vanilla_lstm_forward.1} parent=1 // pred_check
      _
    $region27: #{vanilla_lstm_forward.1} parent=1 // pred_check_branch
      %26 = sbr.rel (0) target = $region29
    $region28: #{vanilla_lstm_forward.1} parent=1 // pred_region
      _
    $region29: #{vanilla_lstm_forward.1} parent=1 // pred_fallthru
      _
    %vm27 = vcmask 785408
    %v28 = vsel %vm27, 0.5, 1.0
    %v29 = vsel %vm27, 0.5, 0.0
    %v30 = vld [vmem:[%s0] sm:$0xff]
    %v31 = vld [vmem:[%s0 + $0x8] sm:$0xff]
    %v32 = vld [vmem:[%s1] sm:$0xff]
    %v33 = vld [vmem:[%s1 + $0x8] sm:$0xff]
    %v34 = vld [vmem:[%s2] sm:$0x1]
    %v36 = vlaneseq
    %v37 = vshrl.u32 %v36, 7
    %v38 = vsub.s32 0, %v37
    %v39 = vrot.slane %v34, %v38
    %vm41 = vcmask 130048
    %v43 = vsel %vm41, %v30, 0
    %v46 = vsel %vm41, %v31, 0
    %48 = vmatprep.subr.mxu0 0.0
    %49 = vmatpush1.msra.mxu0 0.0
    %50 = vmatprep.subr.mxu0 0.0
    %51 = vmatpush1.msra.mxu0 0.0
    %52 = vmatprep.subr.mxu0 0.0
    %53 = vmatpush1.msra.mxu0 0.0
    %54 = vmatprep.subr.mxu0 0.0
    %55 = vmatpush1.msra.mxu0 0.0
    %56 = vmatprep.subr.mxu0 0.0
    %57 = vmatpush1.msra.mxu0 0.0
    %58 = vmatprep.subr.mxu0 0.0
    %59 = vmatpush1.msra.mxu0 0.0
    %60 = vmatprep.subr.mxu0 0.0
    %61 = vmatpush1.msra.mxu0 0.0
    %62 = vmatprep.subr.mxu0 0.0
    %63 = vmatpush1.msra.mxu0 0.0
    %64 = vmatprep.subr.mxu0 0.0
    %65 = vmatpush1.msra.mxu0 0.0
    %66 = vmatprep.subr.mxu0 0.0
    %67 = vmatpush1.msra.mxu0 0.0
    %68 = vmatprep.subr.mxu0 0.0
    %69 = vmatpush1.msra.mxu0 0.0
    %70 = vmatprep.subr.mxu0 0.0
    %71 = vmatpush1.msra.mxu0 0.0
    %72 = vmatprep.subr.mxu0 0.0
    %73 = vmatpush1.msra.mxu0 0.0
    %74 = vmatprep.subr.mxu0 0.0
    %75 = vmatpush1.msra.mxu0 0.0
    %76 = vmatprep.subr.mxu0 0.0
    %77 = vmatpush1.msra.mxu0 %v33
    %78 = vmatprep.subr.mxu0 0.0
    %79 = vmatpush1.msra.mxu0 %v32
    %80 = vmatprep.subr.mxu0 0.0
    %81 = vmatpush2.msra.mxu0 0.0
    %82 = vmatprep.subr.mxu0 0.0
    %83 = vmatpush2.msra.mxu0 0.0
    %84 = vmatprep.subr.mxu0 0.0
    %85 = vmatpush2.msra.mxu0 0.0
    %86 = vmatprep.subr.mxu0 0.0
    %87 = vmatpush2.msra.mxu0 0.0
    %88 = vmatprep.subr.mxu0 0.0
    %89 = vmatpush2.msra.mxu0 0.0
    %90 = vmatprep.subr.mxu0 0.0
    %91 = vmatpush2.msra.mxu0 0.0
    %92 = vmatprep.subr.mxu0 0.0
    %93 = vmatpush2.msra.mxu0 0.0
    %94 = vmatprep.subr.mxu0 0.0
    %95 = vmatpush2.msra.mxu0 0.0
    %96 = vmatprep.subr.mxu0 0.0
    %97 = vmatpush2.msra.mxu0 0.0
    %98 = vmatprep.subr.mxu0 0.0
    %99 = vmatpush2.msra.mxu0 0.0
    %100 = vmatprep.subr.mxu0 0.0
    %101 = vmatpush2.msra.mxu0 0.0
    %102 = vmatprep.subr.mxu0 0.0
    %103 = vmatpush2.msra.mxu0 0.0
    %104 = vmatprep.subr.mxu0 0.0
    %105 = vmatpush2.msra.mxu0 0.0
    %106 = vmatprep.subr.mxu0 0.0
    %107 = vmatpush2.msra.mxu0 0.0
    %108 = vmatprep.subr.mxu0 0.0
    %109 = vmatpush2.msra.mxu0 0.0
    %110 = vmatprep.subr.mxu0 0.0
    %111 = vmatpush2.msra.mxu0 0.0
    %112 = vmatprep.mubr.f32.mxu0 0.0
    %113 = vmatmul.mubr.f32.gmra.mxu0 %v43
    %v114 = vpop.f32.mrf.mxu0
    %v115 = vadd.f32 %v39, %v114
    %v116 = vpop.f32.mrf.mxu0
    %117 = vmatprep.mubr.f32.mxu0 0.0
    %118 = vmatmul.mubr.f32.gmra.mxu0 %v46
    %v119 = vpop.f32.mrf.mxu0
    %v120 = vadd.f32 %v39, %v119
    %v121 = vpop.f32.mrf.mxu0
    %122 = vdwg.mxu0
    %v123 = vld [vmem:[%s3] sm:$0xff]
    %v124 = vld [vmem:[%s3 + $0x8] sm:$0xff]
    %v125 = vld [vmem:[%s3 + $0x10] sm:$0xff]
    %v126 = vld [vmem:[%s3 + $0x18] sm:$0xff]
    %v127 = vld [vmem:[%s3 + $0x20] sm:$0xff]
    %v128 = vld [vmem:[%s3 + $0x28] sm:$0xff]
    %v129 = vld [vmem:[%s3 + $0x30] sm:$0xff]
    %v130 = vld [vmem:[%s3 + $0x38] sm:$0xff]
    %v131 = vld [vmem:[%s3 + $0x40] sm:$0xff]
    %v132 = vld [vmem:[%s3 + $0x48] sm:$0xff]
    %v133 = vld [vmem:[%s3 + $0x50] sm:$0xff]
    %v134 = vld [vmem:[%s3 + $0x58] sm:$0xff]
    %v135 = vld [vmem:[%s3 + $0x60] sm:$0xff]
    %v136 = vld [vmem:[%s3 + $0x68] sm:$0xff]
    %v137 = vld [vmem:[%s3 + $0x70] sm:$0xff]
    %v138 = vld [vmem:[%s3 + $0x78] sm:$0xff]
    %v139 = vld [vmem:[%s4] sm:$0x3]
    %v141 = vlaneseq
    %v142 = vshrl.u32 %v141, 7
    %v143 = vsub.s32 0, %v142
    %v144 = vrot.slane %v139, %v143
    %v145 = vlaneseq
    %v146 = vshrl.u32 %v145, 7
    %v147 = vsub.s32 1, %v146
    %v148 = vrot.slane %v139, %v147
    %v151 = vtanh.pop %v115
    %v152 = vmul.f32 %v151, %v28
    %v153 = vadd.f32 %v152, %v29
    %v154 = vmul.f32 %v153, 0.0
    %156 = vrot.lane.b32.xlu0 %v153, 32
    %v157 = vpop.permute.xlu0 %156
    %v159 = vmul.f32 %v153, %v157
    %161 = vrot.lane.b32.xlu0 %v159, 32
    %v162 = vpop.permute.xlu0 %161
    %v164 = vadd.f32 %v154, %v162
    %v165 = vtanh.pop %v164
    %167 = vrot.lane.b32.xlu0 %v165, 32
    %v168 = vpop.permute.xlu0 %167
    %v170 = vmul.f32 %v153, %v168
    %172 = vrot.lane.b32.xlu0 %v170, 64
    %v173 = vpop.permute.xlu0 %172
    %vm175 = vcmask 261120
    %v176 = vsel %vm175, %v173, 0.0
    %vm177 = vcmask 523264
    %v179 = vsel %vm177, %v176, 0
    %181 = vmatprep.subr.mxu0 0.0
    %182 = vmatpush1.msra.mxu0 0.0
    %183 = vmatprep.subr.mxu0 0.0
    %184 = vmatpush1.msra.mxu0 0.0
    %185 = vmatprep.subr.mxu0 0.0
    %186 = vmatpush1.msra.mxu0 0.0
    %187 = vmatprep.subr.mxu0 0.0
    %188 = vmatpush1.msra.mxu0 0.0
    %189 = vmatprep.subr.mxu0 0.0
    %190 = vmatpush1.msra.mxu0 0.0
    %191 = vmatprep.subr.mxu0 0.0
    %192 = vmatpush1.msra.mxu0 0.0
    %193 = vmatprep.subr.mxu0 0.0
    %194 = vmatpush1.msra.mxu0 0.0
    %195 = vmatprep.subr.mxu0 0.0
    %196 = vmatpush1.msra.mxu0 0.0
    %197 = vmatprep.subr.mxu0 %v138
    %198 = vmatpush1.msra.mxu0 %v137
    %199 = vmatprep.subr.mxu0 %v136
    %200 = vmatpush1.msra.mxu0 %v135
    %201 = vmatprep.subr.mxu0 %v134
    %202 = vmatpush1.msra.mxu0 %v133
    %203 = vmatprep.subr.mxu0 %v132
    %204 = vmatpush1.msra.mxu0 %v131
    %205 = vmatprep.subr.mxu0 %v130
    %206 = vmatpush1.msra.mxu0 %v129
    %207 = vmatprep.subr.mxu0 %v128
    %208 = vmatpush1.msra.mxu0 %v127
    %209 = vmatprep.subr.mxu0 %v126
    %210 = vmatpush1.msra.mxu0 %v125
    %211 = vmatprep.subr.mxu0 %v124
    %212 = vmatpush1.msra.mxu0 %v123
    %213 = vmatprep.subr.mxu0 0.0
    %214 = vmatpush2.msra.mxu0 0.0
    %215 = vmatprep.subr.mxu0 0.0
    %216 = vmatpush2.msra.mxu0 0.0
    %217 = vmatprep.subr.mxu0 0.0
    %218 = vmatpush2.msra.mxu0 0.0
    %219 = vmatprep.subr.mxu0 0.0
    %220 = vmatpush2.msra.mxu0 0.0
    %221 = vmatprep.subr.mxu0 0.0
    %222 = vmatpush2.msra.mxu0 0.0
    %223 = vmatprep.subr.mxu0 0.0
    %224 = vmatpush2.msra.mxu0 0.0
    %225 = vmatprep.subr.mxu0 0.0
    %226 = vmatpush2.msra.mxu0 0.0
    %227 = vmatprep.subr.mxu0 0.0
    %228 = vmatpush2.msra.mxu0 0.0
    %229 = vmatprep.subr.mxu0 0.0
    %230 = vmatpush2.msra.mxu0 0.0
    %231 = vmatprep.subr.mxu0 0.0
    %232 = vmatpush2.msra.mxu0 0.0
    %233 = vmatprep.subr.mxu0 0.0
    %234 = vmatpush2.msra.mxu0 0.0
    %235 = vmatprep.subr.mxu0 0.0
    %236 = vmatpush2.msra.mxu0 0.0
    %237 = vmatprep.subr.mxu0 0.0
    %238 = vmatpush2.msra.mxu0 0.0
    %239 = vmatprep.subr.mxu0 0.0
    %240 = vmatpush2.msra.mxu0 0.0
    %241 = vmatprep.subr.mxu0 0.0
    %242 = vmatpush2.msra.mxu0 0.0
    %243 = vmatprep.subr.mxu0 0.0
    %244 = vmatpush2.msra.mxu0 0.0
    %245 = vmatprep.mubr.f32.mxu0 0.0
    %246 = vmatmul.mubr.f32.gmra.mxu0 %v179
    %v247 = vpop.f32.mrf.mxu0
    %v248 = vadd.f32 %v144, %v247
    %v249 = vpop.f32.mrf.mxu0
    %v250 = vadd.f32 %v148, %v249
    %251 = vdwg.mxu0
    %v252 = vtanh.pop %v250
    %v253 = vmul.f32 %v252, %v28
    %v254 = vadd.f32 %v253, %v29
    %v255 = vmul.f32 %v254, 0.0
    %257 = vrot.lane.b32.xlu0 %v254, 32
    %v258 = vpop.permute.xlu0 %257
    %v260 = vmul.f32 %v254, %v258
    %262 = vrot.lane.b32.xlu0 %v260, 32
    %v263 = vpop.permute.xlu0 %262
    %v265 = vadd.f32 %v255, %v263
    %v266 = vtanh.pop %v265
    %268 = vrot.lane.b32.xlu0 %v266, 32
    %v269 = vpop.permute.xlu0 %268
    %v271 = vmul.f32 %v254, %v269
    %v273 = vrot.slane %v248, 6
    %v275 = vadd.f32 %v115, %v273
    %v276 = vtanh.pop %v275
    %v278 = vrot.slane %v28, 6
    %v280 = vmul.f32 %v276, %v278
    %v282 = vrot.slane %v29, 6
    %v284 = vadd.f32 %v280, %v282
    %v286 = vrot.slane %v164, 6
    %v288 = vmul.f32 %v284, %v286
    %290 = vrot.lane.b32.xlu0 %v284, 32
    %v291 = vpop.permute.xlu0 %290
    %v293 = vmul.f32 %v284, %v291
    %295 = vrot.lane.b32.xlu0 %v293, 32
    %v296 = vpop.permute.xlu0 %295
    %v298 = vadd.f32 %v288, %v296
    %v299 = vtanh.pop %v298
    %301 = vrot.lane.b32.xlu0 %v299, 32
    %v302 = vpop.permute.xlu0 %301
    %v304 = vmul.f32 %v284, %v302
    %306 = vrot.lane.b32.xlu0 %v304, 64
    %v307 = vpop.permute.xlu0 %306
    %v310 = vrot.slane %v271, 6
    %311 = vrot.lane.b32.xlu0 %v310, 96
    %v312 = vpop.permute.xlu0 %311
    %v314 = vsel %vm175, %v307, %v312
    %v316 = vrot.slane %v314, 2
    %v317 = vsel %vm177, %v316, 0
    %319 = vmatprep.subr.mxu0 0.0
    %320 = vmatpush1.msra.mxu0 0.0
    %321 = vmatprep.subr.mxu0 0.0
    %322 = vmatpush1.msra.mxu0 0.0
    %323 = vmatprep.subr.mxu0 0.0
    %324 = vmatpush1.msra.mxu0 0.0
    %325 = vmatprep.subr.mxu0 0.0
    %326 = vmatpush1.msra.mxu0 0.0
    %327 = vmatprep.subr.mxu0 0.0
    %328 = vmatpush1.msra.mxu0 0.0
    %329 = vmatprep.subr.mxu0 0.0
    %330 = vmatpush1.msra.mxu0 0.0
    %331 = vmatprep.subr.mxu0 0.0
    %332 = vmatpush1.msra.mxu0 0.0
    %333 = vmatprep.subr.mxu0 0.0
    %334 = vmatpush1.msra.mxu0 0.0
    %335 = vmatprep.subr.mxu0 %v138
    %336 = vmatpush1.msra.mxu0 %v137
    %337 = vmatprep.subr.mxu0 %v136
    %338 = vmatpush1.msra.mxu0 %v135
    %339 = vmatprep.subr.mxu0 %v134
    %340 = vmatpush1.msra.mxu0 %v133
    %341 = vmatprep.subr.mxu0 %v132
    %342 = vmatpush1.msra.mxu0 %v131
    %343 = vmatprep.subr.mxu0 %v130
    %344 = vmatpush1.msra.mxu0 %v129
    %345 = vmatprep.subr.mxu0 %v128
    %346 = vmatpush1.msra.mxu0 %v127
    %347 = vmatprep.subr.mxu0 %v126
    %348 = vmatpush1.msra.mxu0 %v125
    %349 = vmatprep.subr.mxu0 %v124
    %350 = vmatpush1.msra.mxu0 %v123
    %351 = vmatprep.subr.mxu0 0.0
    %352 = vmatpush2.msra.mxu0 0.0
    %353 = vmatprep.subr.mxu0 0.0
    %354 = vmatpush2.msra.mxu0 0.0
    %355 = vmatprep.subr.mxu0 0.0
    %356 = vmatpush2.msra.mxu0 0.0
    %357 = vmatprep.subr.mxu0 0.0
    %358 = vmatpush2.msra.mxu0 0.0
    %359 = vmatprep.subr.mxu0 0.0
    %360 = vmatpush2.msra.mxu0 0.0
    %361 = vmatprep.subr.mxu0 0.0
    %362 = vmatpush2.msra.mxu0 0.0
    %363 = vmatprep.subr.mxu0 0.0
    %364 = vmatpush2.msra.mxu0 0.0
    %365 = vmatprep.subr.mxu0 0.0
    %366 = vmatpush2.msra.mxu0 0.0
    %367 = vmatprep.subr.mxu0 0.0
    %368 = vmatpush2.msra.mxu0 0.0
    %369 = vmatprep.subr.mxu0 0.0
    %370 = vmatpush2.msra.mxu0 0.0
    %371 = vmatprep.subr.mxu0 0.0
    %372 = vmatpush2.msra.mxu0 0.0
    %373 = vmatprep.subr.mxu0 0.0
    %374 = vmatpush2.msra.mxu0 0.0
    %375 = vmatprep.subr.mxu0 0.0
    %376 = vmatpush2.msra.mxu0 0.0
    %377 = vmatprep.subr.mxu0 0.0
    %378 = vmatpush2.msra.mxu0 0.0
    %379 = vmatprep.subr.mxu0 0.0
    %380 = vmatpush2.msra.mxu0 0.0
    %381 = vmatprep.subr.mxu0 0.0
    %382 = vmatpush2.msra.mxu0 0.0
    %383 = vmatprep.mubr.f32.mxu0 0.0
    %384 = vmatmul.mubr.f32.gmra.mxu0 %v317
    %v385 = vpop.f32.mrf.mxu0
    %v386 = vadd.f32 %v144, %v385
    %v387 = vpop.f32.mrf.mxu0
    %v388 = vadd.f32 %v148, %v387
    %389 = vdwg.mxu0
    %v390 = vtanh.pop %v388
    %v391 = vmul.f32 %v390, %v28
    %v392 = vadd.f32 %v391, %v29
    %v393 = vmul.f32 %v392, %v265
    %395 = vrot.lane.b32.xlu0 %v392, 32
    %v396 = vpop.permute.xlu0 %395
    %v398 = vmul.f32 %v392, %v396
    %400 = vrot.lane.b32.xlu0 %v398, 32
    %v401 = vpop.permute.xlu0 %400
    %v403 = vadd.f32 %v393, %v401
    %v404 = vtanh.pop %v403
    %406 = vrot.lane.b32.xlu0 %v404, 32
    %v407 = vpop.permute.xlu0 %406
    %v409 = vmul.f32 %v392, %v407
    %v411 = vrot.slane %v386, 4
    %v413 = vadd.f32 %v115, %v411
    %v414 = vtanh.pop %v413
    %v415 = vrot.slane %v28, 4
    %v417 = vmul.f32 %v414, %v415
    %v418 = vrot.slane %v29, 4
    %v420 = vadd.f32 %v417, %v418
    %v422 = vrot.slane %v298, 6
    %v424 = vmul.f32 %v420, %v422
    %426 = vrot.lane.b32.xlu0 %v420, 32
    %v427 = vpop.permute.xlu0 %426
    %v429 = vmul.f32 %v420, %v427
    %431 = vrot.lane.b32.xlu0 %v429, 32
    %v432 = vpop.permute.xlu0 %431
    %v434 = vadd.f32 %v424, %v432
    %v435 = vtanh.pop %v434
    %437 = vrot.lane.b32.xlu0 %v435, 32
    %v438 = vpop.permute.xlu0 %437
    %v440 = vmul.f32 %v420, %v438
    %442 = vrot.lane.b32.xlu0 %v440, 64
    %v443 = vpop.permute.xlu0 %442
    %v446 = vrot.slane %v409, 4
    %447 = vrot.lane.b32.xlu0 %v446, 96
    %v448 = vpop.permute.xlu0 %447
    %v450 = vsel %vm175, %v443, %v448
    %v452 = vrot.slane %v450, 4
    %v453 = vsel %vm177, %v452, 0
    %455 = vmatprep.subr.mxu0 0.0
    %456 = vmatpush1.msra.mxu0 0.0
    %457 = vmatprep.subr.mxu0 0.0
    %458 = vmatpush1.msra.mxu0 0.0
    %459 = vmatprep.subr.mxu0 0.0
    %460 = vmatpush1.msra.mxu0 0.0
    %461 = vmatprep.subr.mxu0 0.0
    %462 = vmatpush1.msra.mxu0 0.0
    %463 = vmatprep.subr.mxu0 0.0
    %464 = vmatpush1.msra.mxu0 0.0
    %465 = vmatprep.subr.mxu0 0.0
    %466 = vmatpush1.msra.mxu0 0.0
    %467 = vmatprep.subr.mxu0 0.0
    %468 = vmatpush1.msra.mxu0 0.0
    %469 = vmatprep.subr.mxu0 0.0
    %470 = vmatpush1.msra.mxu0 0.0
    %471 = vmatprep.subr.mxu0 %v138
    %472 = vmatpush1.msra.mxu0 %v137
    %473 = vmatprep.subr.mxu0 %v136
    %474 = vmatpush1.msra.mxu0 %v135
    %475 = vmatprep.subr.mxu0 %v134
    %476 = vmatpush1.msra.mxu0 %v133
    %477 = vmatprep.subr.mxu0 %v132
    %478 = vmatpush1.msra.mxu0 %v131
    %479 = vmatprep.subr.mxu0 %v130
    %480 = vmatpush1.msra.mxu0 %v129
    %481 = vmatprep.subr.mxu0 %v128
    %482 = vmatpush1.msra.mxu0 %v127
    %483 = vmatprep.subr.mxu0 %v126
    %484 = vmatpush1.msra.mxu0 %v125
    %485 = vmatprep.subr.mxu0 %v124
    %486 = vmatpush1.msra.mxu0 %v123
    %487 = vmatprep.subr.mxu0 0.0
    %488 = vmatpush2.msra.mxu0 0.0
    %489 = vmatprep.subr.mxu0 0.0
    %490 = vmatpush2.msra.mxu0 0.0
    %491 = vmatprep.subr.mxu0 0.0
    %492 = vmatpush2.msra.mxu0 0.0
    %493 = vmatprep.subr.mxu0 0.0
    %494 = vmatpush2.msra.mxu0 0.0
    %495 = vmatprep.subr.mxu0 0.0
    %496 = vmatpush2.msra.mxu0 0.0
    %497 = vmatprep.subr.mxu0 0.0
    %498 = vmatpush2.msra.mxu0 0.0
    %499 = vmatprep.subr.mxu0 0.0
    %500 = vmatpush2.msra.mxu0 0.0
    %501 = vmatprep.subr.mxu0 0.0
    %502 = vmatpush2.msra.mxu0 0.0
    %503 = vmatprep.subr.mxu0 0.0
    %504 = vmatpush2.msra.mxu0 0.0
    %505 = vmatprep.subr.mxu0 0.0
    %506 = vmatpush2.msra.mxu0 0.0
    %507 = vmatprep.subr.mxu0 0.0
    %508 = vmatpush2.msra.mxu0 0.0
    %509 = vmatprep.subr.mxu0 0.0
    %510 = vmatpush2.msra.mxu0 0.0
    %511 = vmatprep.subr.mxu0 0.0
    %512 = vmatpush2.msra.mxu0 0.0
    %513 = vmatprep.subr.mxu0 0.0
    %514 = vmatpush2.msra.mxu0 0.0
    %515 = vmatprep.subr.mxu0 0.0
    %516 = vmatpush2.msra.mxu0 0.0
    %517 = vmatprep.subr.mxu0 0.0
    %518 = vmatpush2.msra.mxu0 0.0
    %519 = vmatprep.mubr.f32.mxu0 0.0
    %520 = vmatmul.mubr.f32.gmra.mxu0 %v453
    %v521 = vpop.f32.mrf.mxu0
    %v522 = vadd.f32 %v144, %v521
    %v523 = vpop.f32.mrf.mxu0
    %v524 = vadd.f32 %v148, %v523
    %525 = vdwg.mxu0
    %v526 = vtanh.pop %v524
    %v527 = vmul.f32 %v526, %v28
    %v528 = vadd.f32 %v527, %v29
    %v529 = vmul.f32 %v528, %v403
    %531 = vrot.lane.b32.xlu0 %v528, 32
    %v532 = vpop.permute.xlu0 %531
    %v534 = vmul.f32 %v528, %v532
    %536 = vrot.lane.b32.xlu0 %v534, 32
    %v537 = vpop.permute.xlu0 %536
    %v539 = vadd.f32 %v529, %v537
    %v540 = vtanh.pop %v539
    %542 = vrot.lane.b32.xlu0 %v540, 32
    %v543 = vpop.permute.xlu0 %542
    %v545 = vmul.f32 %v528, %v543
    %v547 = vrot.slane %v522, 2
    %v549 = vadd.f32 %v115, %v547
    %v550 = vtanh.pop %v549
    %v551 = vrot.slane %v28, 2
    %v553 = vmul.f32 %v550, %v551
    %v554 = vrot.slane %v29, 2
    %v556 = vadd.f32 %v553, %v554
    %v558 = vrot.slane %v434, 6
    %v560 = vmul.f32 %v556, %v558
    %562 = vrot.lane.b32.xlu0 %v556, 32
    %v563 = vpop.permute.xlu0 %562
    %v565 = vmul.f32 %v556, %v563
    %567 = vrot.lane.b32.xlu0 %v565, 32
    %v568 = vpop.permute.xlu0 %567
    %v570 = vadd.f32 %v560, %v568
    %v571 = vtanh.pop %v570
    %573 = vrot.lane.b32.xlu0 %v571, 32
    %v574 = vpop.permute.xlu0 %573
    %v576 = vmul.f32 %v556, %v574
    %578 = vrot.lane.b32.xlu0 %v576, 64
    %v579 = vpop.permute.xlu0 %578
    %v582 = vrot.slane %v545, 2
    %583 = vrot.lane.b32.xlu0 %v582, 96
    %v584 = vpop.permute.xlu0 %583
    %v586 = vsel %vm175, %v579, %v584
    %v588 = vrot.slane %v586, 6
    %v589 = vsel %vm177, %v588, 0
    %591 = vmatprep.subr.mxu0 0.0
    %592 = vmatpush1.msra.mxu0 0.0
    %593 = vmatprep.subr.mxu0 0.0
    %594 = vmatpush1.msra.mxu0 0.0
    %595 = vmatprep.subr.mxu0 0.0
    %596 = vmatpush1.msra.mxu0 0.0
    %597 = vmatprep.subr.mxu0 0.0
    %598 = vmatpush1.msra.mxu0 0.0
    %599 = vmatprep.subr.mxu0 0.0
    %600 = vmatpush1.msra.mxu0 0.0
    %601 = vmatprep.subr.mxu0 0.0
    %602 = vmatpush1.msra.mxu0 0.0
    %603 = vmatprep.subr.mxu0 0.0
    %604 = vmatpush1.msra.mxu0 0.0
    %605 = vmatprep.subr.mxu0 0.0
    %606 = vmatpush1.msra.mxu0 0.0
    %607 = vmatprep.subr.mxu0 %v138
    %608 = vmatpush1.msra.mxu0 %v137
    %609 = vmatprep.subr.mxu0 %v136
    %610 = vmatpush1.msra.mxu0 %v135
    %611 = vmatprep.subr.mxu0 %v134
    %612 = vmatpush1.msra.mxu0 %v133
    %613 = vmatprep.subr.mxu0 %v132
    %614 = vmatpush1.msra.mxu0 %v131
    %615 = vmatprep.subr.mxu0 %v130
    %616 = vmatpush1.msra.mxu0 %v129
    %617 = vmatprep.subr.mxu0 %v128
    %618 = vmatpush1.msra.mxu0 %v127
    %619 = vmatprep.subr.mxu0 %v126
    %620 = vmatpush1.msra.mxu0 %v125
    %621 = vmatprep.subr.mxu0 %v124
    %622 = vmatpush1.msra.mxu0 %v123
    %623 = vmatprep.subr.mxu0 0.0
    %624 = vmatpush2.msra.mxu0 0.0
    %625 = vmatprep.subr.mxu0 0.0
    %626 = vmatpush2.msra.mxu0 0.0
    %627 = vmatprep.subr.mxu0 0.0
    %628 = vmatpush2.msra.mxu0 0.0
    %629 = vmatprep.subr.mxu0 0.0
    %630 = vmatpush2.msra.mxu0 0.0
    %631 = vmatprep.subr.mxu0 0.0
    %632 = vmatpush2.msra.mxu0 0.0
    %633 = vmatprep.subr.mxu0 0.0
    %634 = vmatpush2.msra.mxu0 0.0
    %635 = vmatprep.subr.mxu0 0.0
    %636 = vmatpush2.msra.mxu0 0.0
    %637 = vmatprep.subr.mxu0 0.0
    %638 = vmatpush2.msra.mxu0 0.0
    %639 = vmatprep.subr.mxu0 0.0
    %640 = vmatpush2.msra.mxu0 0.0
    %641 = vmatprep.subr.mxu0 0.0
    %642 = vmatpush2.msra.mxu0 0.0
    %643 = vmatprep.subr.mxu0 0.0
    %644 = vmatpush2.msra.mxu0 0.0
    %645 = vmatprep.subr.mxu0 0.0
    %646 = vmatpush2.msra.mxu0 0.0
    %647 = vmatprep.subr.mxu0 0.0
    %648 = vmatpush2.msra.mxu0 0.0
    %649 = vmatprep.subr.mxu0 0.0
    %650 = vmatpush2.msra.mxu0 0.0
    %651 = vmatprep.subr.mxu0 0.0
    %652 = vmatpush2.msra.mxu0 0.0
    %653 = vmatprep.subr.mxu0 0.0
    %654 = vmatpush2.msra.mxu0 0.0
    %655 = vmatprep.mubr.f32.mxu0 0.0
    %656 = vmatmul.mubr.f32.gmra.mxu0 %v589
    %v657 = vpop.f32.mrf.mxu0
    %v658 = vadd.f32 %v144, %v657
    %v659 = vpop.f32.mrf.mxu0
    %v660 = vadd.f32 %v148, %v659
    %661 = vdwg.mxu0
    %v662 = vtanh.pop %v660
    %v663 = vmul.f32 %v662, %v28
    %v664 = vadd.f32 %v663, %v29
    %v665 = vmul.f32 %v664, %v539
    %667 = vrot.lane.b32.xlu0 %v664, 32
    %v668 = vpop.permute.xlu0 %667
    %v670 = vmul.f32 %v664, %v668
    %672 = vrot.lane.b32.xlu0 %v670, 32
    %v673 = vpop.permute.xlu0 %672
    %v675 = vadd.f32 %v665, %v673
    %v676 = vtanh.pop %v675
    %678 = vrot.lane.b32.xlu0 %v676, 32
    %v679 = vpop.permute.xlu0 %678
    %v681 = vmul.f32 %v664, %v679
    %v682 = vadd.f32 %v120, %v658
    %v683 = vtanh.pop %v682
    %v684 = vmul.f32 %v683, %v28
    %v685 = vadd.f32 %v684, %v29
    %v687 = vrot.slane %v570, 6
    %v689 = vmul.f32 %v685, %v687
    %691 = vrot.lane.b32.xlu0 %v685, 32
    %v692 = vpop.permute.xlu0 %691
    %v694 = vmul.f32 %v685, %v692
    %696 = vrot.lane.b32.xlu0 %v694, 32
    %v697 = vpop.permute.xlu0 %696
    %v699 = vadd.f32 %v689, %v697
    %v700 = vtanh.pop %v699
    %702 = vrot.lane.b32.xlu0 %v700, 32
    %v703 = vpop.permute.xlu0 %702
    %v705 = vmul.f32 %v685, %v703
    %707 = vrot.lane.b32.xlu0 %v705, 64
    %v708 = vpop.permute.xlu0 %707
    %711 = vrot.lane.b32.xlu0 %v681, 96
    %v712 = vpop.permute.xlu0 %711
    %v714 = vsel %vm175, %v708, %v712
    %v716 = vsel %vm177, %v714, 0
    %718 = vmatprep.subr.mxu0 0.0
    %719 = vmatpush1.msra.mxu0 0.0
    %720 = vmatprep.subr.mxu0 0.0
    %721 = vmatpush1.msra.mxu0 0.0
    %722 = vmatprep.subr.mxu0 0.0
    %723 = vmatpush1.msra.mxu0 0.0
    %724 = vmatprep.subr.mxu0 0.0
    %725 = vmatpush1.msra.mxu0 0.0
    %726 = vmatprep.subr.mxu0 0.0
    %727 = vmatpush1.msra.mxu0 0.0
    %728 = vmatprep.subr.mxu0 0.0
    %729 = vmatpush1.msra.mxu0 0.0
    %730 = vmatprep.subr.mxu0 0.0
    %731 = vmatpush1.msra.mxu0 0.0
    %732 = vmatprep.subr.mxu0 0.0
    %733 = vmatpush1.msra.mxu0 0.0
    %734 = vmatprep.subr.mxu0 %v138
    %735 = vmatpush1.msra.mxu0 %v137
    %736 = vmatprep.subr.mxu0 %v136
    %737 = vmatpush1.msra.mxu0 %v135
    %738 = vmatprep.subr.mxu0 %v134
    %739 = vmatpush1.msra.mxu0 %v133
    %740 = vmatprep.subr.mxu0 %v132
    %741 = vmatpush1.msra.mxu0 %v131
    %742 = vmatprep.subr.mxu0 %v130
    %743 = vmatpush1.msra.mxu0 %v129
    %744 = vmatprep.subr.mxu0 %v128
    %745 = vmatpush1.msra.mxu0 %v127
    %746 = vmatprep.subr.mxu0 %v126
    %747 = vmatpush1.msra.mxu0 %v125
    %748 = vmatprep.subr.mxu0 %v124
    %749 = vmatpush1.msra.mxu0 %v123
    %750 = vmatprep.subr.mxu0 0.0
    %751 = vmatpush2.msra.mxu0 0.0
    %752 = vmatprep.subr.mxu0 0.0
    %753 = vmatpush2.msra.mxu0 0.0
    %754 = vmatprep.subr.mxu0 0.0
    %755 = vmatpush2.msra.mxu0 0.0
    %756 = vmatprep.subr.mxu0 0.0
    %757 = vmatpush2.msra.mxu0 0.0
    %758 = vmatprep.subr.mxu0 0.0
    %759 = vmatpush2.msra.mxu0 0.0
    %760 = vmatprep.subr.mxu0 0.0
    %761 = vmatpush2.msra.mxu0 0.0
    %762 = vmatprep.subr.mxu0 0.0
    %763 = vmatpush2.msra.mxu0 0.0
    %764 = vmatprep.subr.mxu0 0.0
    %765 = vmatpush2.msra.mxu0 0.0
    %766 = vmatprep.subr.mxu0 0.0
    %767 = vmatpush2.msra.mxu0 0.0
    %768 = vmatprep.subr.mxu0 0.0
    %769 = vmatpush2.msra.mxu0 0.0
    %770 = vmatprep.subr.mxu0 0.0
    %771 = vmatpush2.msra.mxu0 0.0
    %772 = vmatprep.subr.mxu0 0.0
    %773 = vmatpush2.msra.mxu0 0.0
    %774 = vmatprep.subr.mxu0 0.0
    %775 = vmatpush2.msra.mxu0 0.0
    %776 = vmatprep.subr.mxu0 0.0
    %777 = vmatpush2.msra.mxu0 0.0
    %778 = vmatprep.subr.mxu0 0.0
    %779 = vmatpush2.msra.mxu0 0.0
    %780 = vmatprep.subr.mxu0 0.0
    %781 = vmatpush2.msra.mxu0 0.0
    %782 = vmatprep.mubr.f32.mxu0 0.0
    %783 = vmatmul.mubr.f32.gmra.mxu0 %v716
    %v784 = vpop.f32.mrf.mxu0
    %v785 = vadd.f32 %v144, %v784
    %v786 = vpop.f32.mrf.mxu0
    %v787 = vadd.f32 %v148, %v786
    %788 = vdwg.mxu0
    %v789 = vtanh.pop %v787
    %v790 = vmul.f32 %v789, %v28
    %v791 = vadd.f32 %v790, %v29
    %v792 = vmul.f32 %v791, %v675
    %794 = vrot.lane.b32.xlu0 %v791, 32
    %v795 = vpop.permute.xlu0 %794
    %v797 = vmul.f32 %v791, %v795
    %799 = vrot.lane.b32.xlu0 %v797, 32
    %v800 = vpop.permute.xlu0 %799
    %v802 = vadd.f32 %v792, %v800
    %v803 = vtanh.pop %v802
    %805 = vrot.lane.b32.xlu0 %v803, 32
    %v806 = vpop.permute.xlu0 %805
    %v808 = vmul.f32 %v791, %v806
    %v810 = vrot.slane %v785, 6
    %v812 = vadd.f32 %v120, %v810
    %v813 = vtanh.pop %v812
    %v814 = vmul.f32 %v813, %v278
    %v815 = vadd.f32 %v814, %v282
    %v817 = vrot.slane %v699, 6
    %v819 = vmul.f32 %v815, %v817
    %821 = vrot.lane.b32.xlu0 %v815, 32
    %v822 = vpop.permute.xlu0 %821
    %v824 = vmul.f32 %v815, %v822
    %826 = vrot.lane.b32.xlu0 %v824, 32
    %v827 = vpop.permute.xlu0 %826
    %v829 = vadd.f32 %v819, %v827
    %v830 = vtanh.pop %v829
    %832 = vrot.lane.b32.xlu0 %v830, 32
    %v833 = vpop.permute.xlu0 %832
    %v835 = vmul.f32 %v815, %v833
    %837 = vrot.lane.b32.xlu0 %v835, 64
    %v838 = vpop.permute.xlu0 %837
    %v841 = vrot.slane %v808, 6
    %842 = vrot.lane.b32.xlu0 %v841, 96
    %v843 = vpop.permute.xlu0 %842
    %v845 = vsel %vm175, %v838, %v843
    %v847 = vrot.slane %v845, 2
    %v848 = vsel %vm177, %v847, 0
    %850 = vmatprep.subr.mxu0 0.0
    %851 = vmatpush1.msra.mxu0 0.0
    %852 = vmatprep.subr.mxu0 0.0
    %853 = vmatpush1.msra.mxu0 0.0
    %854 = vmatprep.subr.mxu0 0.0
    %855 = vmatpush1.msra.mxu0 0.0
    %856 = vmatprep.subr.mxu0 0.0
    %857 = vmatpush1.msra.mxu0 0.0
    %858 = vmatprep.subr.mxu0 0.0
    %859 = vmatpush1.msra.mxu0 0.0
    %860 = vmatprep.subr.mxu0 0.0
    %861 = vmatpush1.msra.mxu0 0.0
    %862 = vmatprep.subr.mxu0 0.0
    %863 = vmatpush1.msra.mxu0 0.0
    %864 = vmatprep.subr.mxu0 0.0
    %865 = vmatpush1.msra.mxu0 0.0
    %866 = vmatprep.subr.mxu0 %v138
    %867 = vmatpush1.msra.mxu0 %v137
    %868 = vmatprep.subr.mxu0 %v136
    %869 = vmatpush1.msra.mxu0 %v135
    %870 = vmatprep.subr.mxu0 %v134
    %871 = vmatpush1.msra.mxu0 %v133
    %872 = vmatprep.subr.mxu0 %v132
    %873 = vmatpush1.msra.mxu0 %v131
    %874 = vmatprep.subr.mxu0 %v130
    %875 = vmatpush1.msra.mxu0 %v129
    %876 = vmatprep.subr.mxu0 %v128
    %877 = vmatpush1.msra.mxu0 %v127
    %878 = vmatprep.subr.mxu0 %v126
    %879 = vmatpush1.msra.mxu0 %v125
    %880 = vmatprep.subr.mxu0 %v124
    %881 = vmatpush1.msra.mxu0 %v123
    %882 = vmatprep.subr.mxu0 0.0
    %883 = vmatpush2.msra.mxu0 0.0
    %884 = vmatprep.subr.mxu0 0.0
    %885 = vmatpush2.msra.mxu0 0.0
    %886 = vmatprep.subr.mxu0 0.0
    %887 = vmatpush2.msra.mxu0 0.0
    %888 = vmatprep.subr.mxu0 0.0
    %889 = vmatpush2.msra.mxu0 0.0
    %890 = vmatprep.subr.mxu0 0.0
    %891 = vmatpush2.msra.mxu0 0.0
    %892 = vmatprep.subr.mxu0 0.0
    %893 = vmatpush2.msra.mxu0 0.0
    %894 = vmatprep.subr.mxu0 0.0
    %895 = vmatpush2.msra.mxu0 0.0
    %896 = vmatprep.subr.mxu0 0.0
    %897 = vmatpush2.msra.mxu0 0.0
    %898 = vmatprep.subr.mxu0 0.0
    %899 = vmatpush2.msra.mxu0 0.0
    %900 = vmatprep.subr.mxu0 0.0
    %901 = vmatpush2.msra.mxu0 0.0
    %902 = vmatprep.subr.mxu0 0.0
    %903 = vmatpush2.msra.mxu0 0.0
    %904 = vmatprep.subr.mxu0 0.0
    %905 = vmatpush2.msra.mxu0 0.0
    %906 = vmatprep.subr.mxu0 0.0
    %907 = vmatpush2.msra.mxu0 0.0
    %908 = vmatprep.subr.mxu0 0.0
    %909 = vmatpush2.msra.mxu0 0.0
    %910 = vmatprep.subr.mxu0 0.0
    %911 = vmatpush2.msra.mxu0 0.0
    %912 = vmatprep.subr.mxu0 0.0
    %913 = vmatpush2.msra.mxu0 0.0
    %914 = vmatprep.mubr.f32.mxu0 0.0
    %915 = vmatmul.mubr.f32.gmra.mxu0 %v848
    %v916 = vpop.f32.mrf.mxu0
    %v917 = vadd.f32 %v144, %v916
    %v918 = vpop.f32.mrf.mxu0
    %v919 = vadd.f32 %v148, %v918
    %920 = vdwg.mxu0
    %v921 = vtanh.pop %v919
    %v922 = vmul.f32 %v921, %v28
    %v923 = vadd.f32 %v922, %v29
    %v924 = vmul.f32 %v923, %v802
    %926 = vrot.lane.b32.xlu0 %v923, 32
    %v927 = vpop.permute.xlu0 %926
    %v929 = vmul.f32 %v923, %v927
    %931 = vrot.lane.b32.xlu0 %v929, 32
    %v932 = vpop.permute.xlu0 %931
    %v934 = vadd.f32 %v924, %v932
    %v935 = vtanh.pop %v934
    %937 = vrot.lane.b32.xlu0 %v935, 32
    %v938 = vpop.permute.xlu0 %937
    %v940 = vmul.f32 %v923, %v938
    %v942 = vrot.slane %v917, 4
    %v944 = vadd.f32 %v120, %v942
    %v945 = vtanh.pop %v944
    %v946 = vmul.f32 %v945, %v415
    %v947 = vadd.f32 %v946, %v418
    %v949 = vrot.slane %v829, 6
    %v951 = vmul.f32 %v947, %v949
    %953 = vrot.lane.b32.xlu0 %v947, 32
    %v954 = vpop.permute.xlu0 %953
    %v956 = vmul.f32 %v947, %v954
    %958 = vrot.lane.b32.xlu0 %v956, 32
    %v959 = vpop.permute.xlu0 %958
    %v961 = vadd.f32 %v951, %v959
    %v962 = vtanh.pop %v961
    %964 = vrot.lane.b32.xlu0 %v962, 32
    %v965 = vpop.permute.xlu0 %964
    %v967 = vmul.f32 %v947, %v965
    %969 = vrot.lane.b32.xlu0 %v967, 64
    %v970 = vpop.permute.xlu0 %969
    %v973 = vrot.slane %v940, 4
    %974 = vrot.lane.b32.xlu0 %v973, 96
    %v975 = vpop.permute.xlu0 %974
    %v977 = vsel %vm175, %v970, %v975
    %v979 = vrot.slane %v977, 4
    %v980 = vsel %vm177, %v979, 0
    %982 = vmatprep.subr.mxu0 0.0
    %983 = vmatpush1.msra.mxu0 0.0
    %984 = vmatprep.subr.mxu0 0.0
    %985 = vmatpush1.msra.mxu0 0.0
    %986 = vmatprep.subr.mxu0 0.0
    %987 = vmatpush1.msra.mxu0 0.0
    %988 = vmatprep.subr.mxu0 0.0
    %989 = vmatpush1.msra.mxu0 0.0
    %990 = vmatprep.subr.mxu0 0.0
    %991 = vmatpush1.msra.mxu0 0.0
    %992 = vmatprep.subr.mxu0 0.0
    %993 = vmatpush1.msra.mxu0 0.0
    %994 = vmatprep.subr.mxu0 0.0
    %995 = vmatpush1.msra.mxu0 0.0
    %996 = vmatprep.subr.mxu0 0.0
    %997 = vmatpush1.msra.mxu0 0.0
    %998 = vmatprep.subr.mxu0 %v138
    %999 = vmatpush1.msra.mxu0 %v137
    %1000 = vmatprep.subr.mxu0 %v136
    %1001 = vmatpush1.msra.mxu0 %v135
    %1002 = vmatprep.subr.mxu0 %v134
    %1003 = vmatpush1.msra.mxu0 %v133
    %1004 = vmatprep.subr.mxu0 %v132
    %1005 = vmatpush1.msra.mxu0 %v131
    %1006 = vmatprep.subr.mxu0 %v130
    %1007 = vmatpush1.msra.mxu0 %v129
    %1008 = vmatprep.subr.mxu0 %v128
    %1009 = vmatpush1.msra.mxu0 %v127
    %1010 = vmatprep.subr.mxu0 %v126
    %1011 = vmatpush1.msra.mxu0 %v125
    %1012 = vmatprep.subr.mxu0 %v124
    %1013 = vmatpush1.msra.mxu0 %v123
    %1014 = vmatprep.subr.mxu0 0.0
    %1015 = vmatpush2.msra.mxu0 0.0
    %1016 = vmatprep.subr.mxu0 0.0
    %1017 = vmatpush2.msra.mxu0 0.0
    %1018 = vmatprep.subr.mxu0 0.0
    %1019 = vmatpush2.msra.mxu0 0.0
    %1020 = vmatprep.subr.mxu0 0.0
    %1021 = vmatpush2.msra.mxu0 0.0
    %1022 = vmatprep.subr.mxu0 0.0
    %1023 = vmatpush2.msra.mxu0 0.0
    %1024 = vmatprep.subr.mxu0 0.0
    %1025 = vmatpush2.msra.mxu0 0.0
    %1026 = vmatprep.subr.mxu0 0.0
    %1027 = vmatpush2.msra.mxu0 0.0
    %1028 = vmatprep.subr.mxu0 0.0
    %1029 = vmatpush2.msra.mxu0 0.0
    %1030 = vmatprep.subr.mxu0 0.0
    %1031 = vmatpush2.msra.mxu0 0.0
    %1032 = vmatprep.subr.mxu0 0.0
    %1033 = vmatpush2.msra.mxu0 0.0
    %1034 = vmatprep.subr.mxu0 0.0
    %1035 = vmatpush2.msra.mxu0 0.0
    %1036 = vmatprep.subr.mxu0 0.0
    %1037 = vmatpush2.msra.mxu0 0.0
    %1038 = vmatprep.subr.mxu0 0.0
    %1039 = vmatpush2.msra.mxu0 0.0
    %1040 = vmatprep.subr.mxu0 0.0
    %1041 = vmatpush2.msra.mxu0 0.0
    %1042 = vmatprep.subr.mxu0 0.0
    %1043 = vmatpush2.msra.mxu0 0.0
    %1044 = vmatprep.subr.mxu0 0.0
    %1045 = vmatpush2.msra.mxu0 0.0
    %1046 = vmatprep.mubr.f32.mxu0 0.0
    %1047 = vmatmul.mubr.f32.gmra.mxu0 %v980
    %v1048 = vpop.f32.mrf.mxu0
    %v1049 = vadd.f32 %v144, %v1048
    %v1050 = vpop.f32.mrf.mxu0
    %v1051 = vadd.f32 %v148, %v1050
    %1052 = vdwg.mxu0
    %v1053 = vtanh.pop %v1051
    %v1054 = vmul.f32 %v1053, %v28
    %v1055 = vadd.f32 %v1054, %v29
    %v1056 = vmul.f32 %v1055, %v934
    %1058 = vrot.lane.b32.xlu0 %v1055, 32
    %v1059 = vpop.permute.xlu0 %1058
    %v1061 = vmul.f32 %v1055, %v1059
    %1063 = vrot.lane.b32.xlu0 %v1061, 32
    %v1064 = vpop.permute.xlu0 %1063
    %v1066 = vadd.f32 %v1056, %v1064
    %v1067 = vtanh.pop %v1066
    %1069 = vrot.lane.b32.xlu0 %v1067, 32
    %v1070 = vpop.permute.xlu0 %1069
    %v1072 = vmul.f32 %v1055, %v1070
    %v1074 = vrot.slane %v1049, 2
    %v1076 = vadd.f32 %v120, %v1074
    %v1077 = vtanh.pop %v1076
    %v1078 = vmul.f32 %v1077, %v551
    %v1079 = vadd.f32 %v1078, %v554
    %v1081 = vrot.slane %v961, 6
    %v1083 = vmul.f32 %v1079, %v1081
    %1085 = vrot.lane.b32.xlu0 %v1079, 32
    %v1086 = vpop.permute.xlu0 %1085
    %v1088 = vmul.f32 %v1079, %v1086
    %1090 = vrot.lane.b32.xlu0 %v1088, 32
    %v1091 = vpop.permute.xlu0 %1090
    %v1093 = vadd.f32 %v1083, %v1091
    %v1094 = vtanh.pop %v1093
    %1096 = vrot.lane.b32.xlu0 %v1094, 32
    %v1097 = vpop.permute.xlu0 %1096
    %v1099 = vmul.f32 %v1079, %v1097
    %1101 = vrot.lane.b32.xlu0 %v1099, 64
    %v1102 = vpop.permute.xlu0 %1101
    %v1105 = vrot.slane %v1072, 2
    %1106 = vrot.lane.b32.xlu0 %v1105, 96
    %v1107 = vpop.permute.xlu0 %1106
    %v1109 = vsel %vm175, %v1102, %v1107
    %v1111 = vrot.slane %v1109, 6
    %v1112 = vsel %vm177, %v1111, 0
    %1114 = vmatprep.subr.mxu0 0.0
    %1115 = vmatpush1.msra.mxu0 0.0
    %1116 = vmatprep.subr.mxu0 0.0
    %1117 = vmatpush1.msra.mxu0 0.0
    %1118 = vmatprep.subr.mxu0 0.0
    %1119 = vmatpush1.msra.mxu0 0.0
    %1120 = vmatprep.subr.mxu0 0.0
    %1121 = vmatpush1.msra.mxu0 0.0
    %1122 = vmatprep.subr.mxu0 0.0
    %1123 = vmatpush1.msra.mxu0 0.0
    %1124 = vmatprep.subr.mxu0 0.0
    %1125 = vmatpush1.msra.mxu0 0.0
    %1126 = vmatprep.subr.mxu0 0.0
    %1127 = vmatpush1.msra.mxu0 0.0
    %1128 = vmatprep.subr.mxu0 0.0
    %1129 = vmatpush1.msra.mxu0 0.0
    %1130 = vmatprep.subr.mxu0 %v138
    %1131 = vmatpush1.msra.mxu0 %v137
    %1132 = vmatprep.subr.mxu0 %v136
    %1133 = vmatpush1.msra.mxu0 %v135
    %1134 = vmatprep.subr.mxu0 %v134
    %1135 = vmatpush1.msra.mxu0 %v133
    %1136 = vmatprep.subr.mxu0 %v132
    %1137 = vmatpush1.msra.mxu0 %v131
    %1138 = vmatprep.subr.mxu0 %v130
    %1139 = vmatpush1.msra.mxu0 %v129
    %1140 = vmatprep.subr.mxu0 %v128
    %1141 = vmatpush1.msra.mxu0 %v127
    %1142 = vmatprep.subr.mxu0 %v126
    %1143 = vmatpush1.msra.mxu0 %v125
    %1144 = vmatprep.subr.mxu0 %v124
    %1145 = vmatpush1.msra.mxu0 %v123
    %1146 = vmatprep.subr.mxu0 0.0
    %1147 = vmatpush2.msra.mxu0 0.0
    %1148 = vmatprep.subr.mxu0 0.0
    %1149 = vmatpush2.msra.mxu0 0.0
    %1150 = vmatprep.subr.mxu0 0.0
    %1151 = vmatpush2.msra.mxu0 0.0
    %1152 = vmatprep.subr.mxu0 0.0
    %1153 = vmatpush2.msra.mxu0 0.0
    %1154 = vmatprep.subr.mxu0 0.0
    %1155 = vmatpush2.msra.mxu0 0.0
    %1156 = vmatprep.subr.mxu0 0.0
    %1157 = vmatpush2.msra.mxu0 0.0
    %1158 = vmatprep.subr.mxu0 0.0
    %1159 = vmatpush2.msra.mxu0 0.0
    %1160 = vmatprep.subr.mxu0 0.0
    %1161 = vmatpush2.msra.mxu0 0.0
    %1162 = vmatprep.subr.mxu0 0.0
    %1163 = vmatpush2.msra.mxu0 0.0
    %1164 = vmatprep.subr.mxu0 0.0
    %1165 = vmatpush2.msra.mxu0 0.0
    %1166 = vmatprep.subr.mxu0 0.0
    %1167 = vmatpush2.msra.mxu0 0.0
    %1168 = vmatprep.subr.mxu0 0.0
    %1169 = vmatpush2.msra.mxu0 0.0
    %1170 = vmatprep.subr.mxu0 0.0
    %1171 = vmatpush2.msra.mxu0 0.0
    %1172 = vmatprep.subr.mxu0 0.0
    %1173 = vmatpush2.msra.mxu0 0.0
    %1174 = vmatprep.subr.mxu0 0.0
    %1175 = vmatpush2.msra.mxu0 0.0
    %1176 = vmatprep.subr.mxu0 0.0
    %1177 = vmatpush2.msra.mxu0 0.0
    %1178 = vmatprep.mubr.f32.mxu0 0.0
    %1179 = vmatmul.mubr.f32.gmra.mxu0 %v1112
    %v1180 = vpop.f32.mrf.mxu0
    %v1181 = vpop.f32.mrf.mxu0
    %v1182 = vadd.f32 %v148, %v1181
    %1183 = vdwg.mxu0
    %v1184 = vtanh.pop %v1182
    %v1185 = vmul.f32 %v1184, %v28
    %v1186 = vadd.f32 %v1185, %v29
    %v1187 = vmul.f32 %v1186, %v1066
    %1189 = vrot.lane.b32.xlu0 %v1186, 32
    %v1190 = vpop.permute.xlu0 %1189
    %v1192 = vmul.f32 %v1186, %v1190
    %1194 = vrot.lane.b32.xlu0 %v1192, 32
    %v1195 = vpop.permute.xlu0 %1194
    %v1197 = vadd.f32 %v1187, %v1195
    %v1198 = vtanh.pop %v1197
    %1200 = vrot.lane.b32.xlu0 %v1198, 32
    %v1201 = vpop.permute.xlu0 %1200
    %v1203 = vmul.f32 %v1186, %v1201
    %v1204 = vld [vmem:[%s5] sm:$0xff]
    %v1205 = vld [vmem:[%s5 + $0x8] sm:$0xff]
    %v1206 = vld [vmem:[%s5 + $0x10] sm:$0xff]
    %v1207 = vld [vmem:[%s5 + $0x18] sm:$0xff]
    %v1208 = vld [vmem:[%s6] sm:$0x1]
    %v1210 = vlaneseq
    %v1211 = vshrl.u32 %v1210, 7
    %v1212 = vsub.s32 0, %v1211
    %v1213 = vrot.slane %v1208, %v1212
    %1216 = vrot.lane.b32.xlu0 %v1203, 64
    %v1217 = vpop.permute.xlu0 %1216
    %v1218 = vsel %vm175, %v1217, 0
    %1220 = vmatprep.subr.mxu0 0.0
    %1221 = vmatpush1.msra.mxu0 0.0
    %1222 = vmatprep.subr.mxu0 0.0
    %1223 = vmatpush1.msra.mxu0 0.0
    %1224 = vmatprep.subr.mxu0 0.0
    %1225 = vmatpush1.msra.mxu0 0.0
    %1226 = vmatprep.subr.mxu0 0.0
    %1227 = vmatpush1.msra.mxu0 0.0
    %1228 = vmatprep.subr.mxu0 0.0
    %1229 = vmatpush1.msra.mxu0 0.0
    %1230 = vmatprep.subr.mxu0 0.0
    %1231 = vmatpush1.msra.mxu0 0.0
    %1232 = vmatprep.subr.mxu0 0.0
    %1233 = vmatpush1.msra.mxu0 0.0
    %1234 = vmatprep.subr.mxu0 0.0
    %1235 = vmatpush1.msra.mxu0 0.0
    %1236 = vmatprep.subr.mxu0 0.0
    %1237 = vmatpush1.msra.mxu0 0.0
    %1238 = vmatprep.subr.mxu0 0.0
    %1239 = vmatpush1.msra.mxu0 0.0
    %1240 = vmatprep.subr.mxu0 0.0
    %1241 = vmatpush1.msra.mxu0 0.0
    %1242 = vmatprep.subr.mxu0 0.0
    %1243 = vmatpush1.msra.mxu0 0.0
    %1244 = vmatprep.subr.mxu0 0.0
    %1245 = vmatpush1.msra.mxu0 %v1207
    %1246 = vmatprep.subr.mxu0 0.0
    %1247 = vmatpush1.msra.mxu0 %v1206
    %1248 = vmatprep.subr.mxu0 0.0
    %1249 = vmatpush1.msra.mxu0 %v1205
    %1250 = vmatprep.subr.mxu0 0.0
    %1251 = vmatpush1.msra.mxu0 %v1204
    %1252 = vmatprep.subr.mxu0 0.0
    %1253 = vmatpush2.msra.mxu0 0.0
    %1254 = vmatprep.subr.mxu0 0.0
    %1255 = vmatpush2.msra.mxu0 0.0
    %1256 = vmatprep.subr.mxu0 0.0
    %1257 = vmatpush2.msra.mxu0 0.0
    %1258 = vmatprep.subr.mxu0 0.0
    %1259 = vmatpush2.msra.mxu0 0.0
    %1260 = vmatprep.subr.mxu0 0.0
    %1261 = vmatpush2.msra.mxu0 0.0
    %1262 = vmatprep.subr.mxu0 0.0
    %1263 = vmatpush2.msra.mxu0 0.0
    %1264 = vmatprep.subr.mxu0 0.0
    %1265 = vmatpush2.msra.mxu0 0.0
    %1266 = vmatprep.subr.mxu0 0.0
    %1267 = vmatpush2.msra.mxu0 0.0
    %1268 = vmatprep.subr.mxu0 0.0
    %1269 = vmatpush2.msra.mxu0 0.0
    %1270 = vmatprep.subr.mxu0 0.0
    %1271 = vmatpush2.msra.mxu0 0.0
    %1272 = vmatprep.subr.mxu0 0.0
    %1273 = vmatpush2.msra.mxu0 0.0
    %1274 = vmatprep.subr.mxu0 0.0
    %1275 = vmatpush2.msra.mxu0 0.0
    %1276 = vmatprep.subr.mxu0 0.0
    %1277 = vmatpush2.msra.mxu0 0.0
    %1278 = vmatprep.subr.mxu0 0.0
    %1279 = vmatpush2.msra.mxu0 0.0
    %1280 = vmatprep.subr.mxu0 0.0
    %1281 = vmatpush2.msra.mxu0 0.0
    %1282 = vmatprep.subr.mxu0 0.0
    %1283 = vmatpush2.msra.mxu0 0.0
    %1284 = vmatprep.mubr.f32.mxu0 0.0
    %1285 = vmatmul.mubr.f32.gmra.mxu0 %v1218
    %v1286 = vpop.f32.mrf.mxu0
    %v1287 = vadd.f32 %v1213, %v1286
    %v1288 = vpop.f32.mrf.mxu0
    %1289 = vdwg.mxu0
    %vm1290 = vcmask 58368
    %1291 = vst.msk [vmem:[#allocation2] sm:$0x3] %vm1290, %v1287
    // Predicated region
    $region30: #{vanilla_lstm_forward.1} parent=1 // pred_check
      _
    $region31: #{vanilla_lstm_forward.1} parent=1 // pred_check_branch
      %1293 = sbr.rel (0) target = $region33
    $region32: #{vanilla_lstm_forward.1} parent=1 // pred_region
      %s1295 = ssub.s32 32, 32
      %1296 = vsyncadd [#allocation3], %s1295
      %s1298 = sshll.u32 [#allocation2], 4
      %s1299 = int_to_ptr.vmem [resolvable:$true] %s1298
      %1301 = dma.vmem_to_hbm [thread:$0]  %s1299, 32, %s7, [#allocation3]
    $region33: #{vanilla_lstm_forward.1} parent=1 // pred_fallthru
      _
    // Predicated region
    $region34: #{vanilla_lstm_forward.1} parent=1 // pred_check
      _
    $region35: #{vanilla_lstm_forward.1} parent=1 // pred_check_branch
      %1303 = sbr.rel (0) target = $region37
    $region36: #{vanilla_lstm_forward.1} parent=1 // pred_region
      %1304 = dma.done [#allocation3], 32
    $region37: #{vanilla_lstm_forward.1} parent=1 // pred_fallthru
      _
    %1305 = vsyncpa [#allocation3], 1

</llo_original>
